<compile_context>
chip_gen: v6e
topology: v6e:2x2x1
jax: 0.10.0
libtpu: 0.0.40
codegen_flags: <defaults>
</compile_context>

<pallas_src>
import functools
import math

import jax
import jax.numpy as jnp
from jax.experimental import pallas as pl
from jax.experimental.pallas import tpu as pltpu

_EPS = 1e-6
_LANE = 128
_SUBLANE = 8


def _round_up(v, m):
    return ((v + m - 1) // m) * m


def _vmem_capacity_bytes():
    """Physical VMEM of the current chip; conservative fallback if unknown."""
    try:
        return int(pltpu.get_tpu_info().vmem_capacity_bytes)
    except Exception:
        return 64 * 1024 * 1024  # v7x per-TC VMEM (smallest of the targets)


# ---------------------------------------------------------------------------
# In-kernel helpers (traced inside the fused kernel body)
# ---------------------------------------------------------------------------
def _layernorm(x):
    # nn.LayerNorm(dim, elementwise_affine=False, eps=1e-6) over the last axis.
    # One-pass stats (sum / sum-of-squares); clamp guards cancellation.
    d = x.shape[-1]
    inv_d = 1.0 / d
    s = jnp.sum(x, axis=-1, keepdims=True)
    ss = jnp.sum(x * x, axis=-1, keepdims=True)
    mean = s * inv_d
    var = jnp.maximum(ss * inv_d - mean * mean, 0.0)
    return (x - mean) * jax.lax.rsqrt(var + _EPS)


def _silu(x):
    # sigmoid(x) == 0.5 * (1 + tanh(x / 2)): a single EUP op per element.
    return x * (0.5 + 0.5 * jnp.tanh(0.5 * x))


# ---------------------------------------------------------------------------
# Fused kernel.  Grid = (batch tiles ["parallel"], stages ["arbitrary"]).
#   stage 0          : first ResBlock (d_in -> H), reads the input tile
#   stage s (1..n)   : uniform ResBlock s-1 (H -> H, residual), weights streamed
#   stage n (== n_uni): additionally applies the classifier head and stores.
# The activation is carried across stages in a VMEM scratch.
# ---------------------------------------------------------------------------
def staged_kernel(x_ref, fw1_ref, fb1_ref, fw2_ref, fb2_ref,
                  uw1_ref, ub1_ref, uw2_ref, ub2_ref,
                  cw_ref, cb_ref, o_ref, act_ref,
                  *, n_uni, first_residual, mxu_dtype):
    s = pl.program_id(1)

    @pl.when(s == 0)
    def _first_block():
        x = x_ref[...].astype(jnp.float32)
        h = _silu(_layernorm(x))                                   # norm1 + SiLU
        h = jnp.dot(h.astype(mxu_dtype), fw1_ref[...],             # linear1
                    preferred_element_type=jnp.float32) + fb1_ref[...]
        h = _silu(_layernorm(h))                                   # norm2 + SiLU
        h = jnp.dot(h.astype(mxu_dtype), fw2_ref[...],             # linear2
                    preferred_element_type=jnp.float32) + fb2_ref[...]
        act_ref[...] = (x + h) if first_residual else h

    @pl.when(s > 0)
    def _uniform_block():
        x = act_ref[...]
        h = _silu(_layernorm(x))
        h = jnp.dot(h.astype(mxu_dtype), uw1_ref[0],
                    preferred_element_type=jnp.float32) + ub1_ref[0]
        h = _silu(_layernorm(h))
        h = jnp.dot(h.astype(mxu_dtype), uw2_ref[0],
                    preferred_element_type=jnp.float32) + ub2_ref[0]
        act_ref[...] = x + h            # uniform blocks are always residual

    @pl.when(s == n_uni)
    def _classifier():
        y = jnp.dot(act_ref[...].astype(mxu_dtype), cw_ref[...],
                    preferred_element_type=jnp.float32) + cb_ref[...]
        o_ref[...] = y.astype(o_ref.dtype)


# ---------------------------------------------------------------------------
# Host-side parameter preparation
# ---------------------------------------------------------------------------
def prepare_params(params, *, mxu_dtype=jnp.bfloat16):
    blocks = params["blocks"]
    first, uni = blocks[0], blocks[1:]
    H = first["w1"].shape[1]
    assert len(uni) >= 1 and all(b["w1"].shape == (H, H) for b in uni), (
        "all blocks after the first must be (hidden, hidden); the torch model "
        "is only shape-valid when out_channels == hidden_size")

    fw1 = first["w1"].astype(mxu_dtype)
    fb1 = first["b1"].reshape(1, -1).astype(jnp.float32)
    fw2 = first["w2"].astype(mxu_dtype)
    fb2 = first["b2"].reshape(1, -1).astype(jnp.float32)
    first_residual = bool(first["residual"])

    uw1 = jnp.stack([b["w1"] for b in uni]).astype(mxu_dtype)               # (n,H,H)
    ub1 = jnp.stack([b["b1"].reshape(1, -1) for b in uni]).astype(jnp.float32)
    uw2 = jnp.stack([b["w2"] for b in uni]).astype(mxu_dtype)
    ub2 = jnp.stack([b["b2"].reshape(1, -1) for b in uni]).astype(jnp.float32)

    class_num = params["cls_w"].shape[1]
    n_pad = _round_up(class_num, _LANE)
    cw = jnp.pad(params["cls_w"], ((0, 0), (0, n_pad - class_num))).astype(mxu_dtype)
    cb = jnp.pad(params["cls_b"], (0, n_pad - class_num)).reshape(1, -1).astype(jnp.float32)

    flat = (fw1, fb1, fw2, fb2, uw1, ub1, uw2, ub2, cw, cb)
    return flat, first_residual, class_num


# ---------------------------------------------------------------------------
# Full forward pass wrapper
# ---------------------------------------------------------------------------
def resnet1d_classifier_forward(params, x_nchw, *, mxu_dtype=jnp.bfloat16):
    flat, first_residual, class_num = prepare_params(params, mxu_dtype=mxu_dtype)
    fw1, fb1, fw2, fb2, uw1, ub1, uw2, ub2, cw, cb = flat
    d_in, H = fw1.shape
    n_uni = uw1.shape[0]
    n_pad = cw.shape[1]

    B = x_nchw.shape[0]
    # x.view(B, -1); fed in the MXU dtype (bf16 halves the largest per-step DMA).
    x = x_nchw.reshape(B, -1).astype(mxu_dtype)
    assert x.shape[1] == d_in

    cap = _vmem_capacity_bytes()

    # Batch padding / tiling.  Small B: one tile (no cross-TC split — this
    # regime is weight-DMA-bound, splitting would only double weight traffic).
    # Large B: 256-row tiles on 128 MiB-VMEM chips (v5e/v6e), 128 on v7x.
    B_pad = _round_up(max(B, _SUBLANE), _SUBLANE)
    if B_pad <= _LANE:
        tb = B_pad
    else:
        tb = 256 if cap >= (100 << 20) else _LANE
        B_pad = _round_up(B_pad, tb)
    if B_pad != B:
        x = jnp.pad(x, ((0, B_pad - B), (0, 0)))

    grid = (B_pad // tb, n_uni + 1)

    def build(single_buffer):
        res_kw = {"pipeline_mode": pl.Buffered(1)} if single_buffer else {}
        stage_map = lambda i, s: (jnp.maximum(s - 1, 0), 0, 0)
        const2 = lambda i, s: (0, 0)

        in_specs = [
            pl.BlockSpec((tb, d_in), lambda i, s: (i, 0)),        # input tile
            pl.BlockSpec(fw1.shape, const2, **res_kw),            # first block (resident)
            pl.BlockSpec(fb1.shape, const2, **res_kw),
            pl.BlockSpec(fw2.shape, const2, **res_kw),
            pl.BlockSpec(fb2.shape, const2, **res_kw),
            pl.BlockSpec((1, H, H), stage_map),                   # streamed blocks
            pl.BlockSpec((1, 1, H), stage_map),
            pl.BlockSpec((1, H, H), stage_map),
            pl.BlockSpec((1, 1, H), stage_map),
            pl.BlockSpec(cw.shape, const2, **res_kw),             # classifier (resident)
            pl.BlockSpec(cb.shape, const2, **res_kw),
        ]
        out_spec = pl.BlockSpec((tb, n_pad), lambda i, s: (i, 0))

        # VMEM budget: 1x single-buffered residents + 2x streamed tiles
        # + activation scratch + f32 temporaries + headroom, capped below the
        # chip's physical VMEM.
        # TODO(synk): for very large d_in*H on v7x the resident first-block
        # weight alone can approach 64 MiB; it would need streaming along d_in.
        w_item = jnp.dtype(mxu_dtype).itemsize
        resident = sum(int(a.size) * a.dtype.itemsize
                       for a in (fw1, fb1, fw2, fb2, cw, cb))
        resident *= (1 if single_buffer else 2)
        streamed = 2 * (tb * d_in * x.dtype.itemsize              # input tile
                        + tb * n_pad * 4                          # output tile
                        + 2 * (H * H * w_item + H * 4))           # one block's w/b
        scratch = tb * H * 4
        interm = 4 * tb * max(d_in, H, n_pad) * 4
        need = resident + streamed + scratch + interm + (4 << 20)
        vmem_limit = int(min(max(need, 32 << 20), cap - (8 << 20)))

        # Advisory cost estimate (per-element transcendental counts).
        flops = (2 * B_pad * (d_in * H + H * H)
                 + n_uni * 2 * B_pad * 2 * H * H
                 + 2 * B_pad * H * n_pad)
        transcendentals = B_pad * (d_in + H + n_uni * 2 * H + 2 * (n_uni + 1))
        bytes_accessed = (int(x.size) * x.dtype.itemsize
                          + sum(int(a.size) * a.dtype.itemsize for a in flat)
                          + B_pad * n_pad * 4)

        kernel = functools.partial(staged_kernel, n_uni=n_uni,
                                   first_residual=first_residual,
                                   mxu_dtype=mxu_dtype)
        return pl.pallas_call(
            kernel,
            out_shape=jax.ShapeDtypeStruct((B_pad, n_pad), jnp.float32),
            grid=grid,
            in_specs=in_specs,
            out_specs=out_spec,
            scratch_shapes=[pltpu.VMEM((tb, H), jnp.float32)],
            compiler_params=pltpu.CompilerParams(
                dimension_semantics=("parallel", "arbitrary"),
                vmem_limit_bytes=vmem_limit),
            cost_estimate=pl.CostEstimate(flops=int(flops),
                                          transcendentals=int(transcendentals),
                                          bytes_accessed=int(bytes_accessed)),
        )

    try:
        y_pad = build(single_buffer=True)(x, *flat)
    except Exception:
        # Fallback: default double-buffering if Buffered(1) is not supported.
        y_pad = build(single_buffer=False)(x, *flat)

    # Slice off batch and lane padding -> (B, class_num) logits.
    return y_pad[:B, :class_num]


# ---------------------------------------------------------------------------
# Pure-JAX reference (for a parity check of the f32 kernel path)
# ---------------------------------------------------------------------------
def reference_forward(params, x_nchw):
    x = x_nchw.reshape(x_nchw.shape[0], -1).astype(jnp.float32)

    def ln(v):
        m = jnp.mean(v, axis=-1, keepdims=True)
        var = jnp.mean((v - m) ** 2, axis=-1, keepdims=True)
        return (v - m) / jnp.sqrt(var + _EPS)

    def silu(v):
        return v * jax.nn.sigmoid(v)

    hi = jax.lax.Precision.HIGHEST
    for blk in params["blocks"]:
        h = silu(ln(x))
        h = jnp.dot(h, blk["w1"], precision=hi) + blk["b1"]
        h = silu(ln(h))
        h = jnp.dot(h, blk["w2"], precision=hi) + blk["b2"]
        x = x + h if blk["residual"] else h
    return jnp.dot(x, params["cls_w"], precision=hi) + params["cls_b"]


# ---------------------------------------------------------------------------
# Parameter construction (mirrors torch xavier_uniform_ + zero bias)
# ---------------------------------------------------------------------------
def _xavier(key, fan_in, fan_out):
    bound = math.sqrt(6.0 / (fan_in + fan_out))
    # stored as (in, out) == transpose of torch's (out, in) weight
    return jax.random.uniform(key, (fan_in, fan_out), jnp.float32, -bound, bound)


def make_params(key, *, input_size, in_channels, hidden_size, out_channels,
                depth, class_num):
    d_in = input_size * input_size * in_channels
    params = {"blocks": []}

    def block_params(k, cin, cout):
        k1, k2 = jax.random.split(k)
        return {
            "w1": _xavier(k1, cin, cout), "b1": jnp.zeros((cout,), jnp.float32),
            "w2": _xavier(k2, cout, cout), "b2": jnp.zeros((cout,), jnp.float32),
            "residual": (cin == cout),   # ResBlock: residual only if in == out
        }

    keys = jax.random.split(key, depth + 3)
    params["blocks"].append(block_params(keys[0], d_in, out_channels))       # first
    for i in range(depth):                                                   # middle
        params["blocks"].append(block_params(keys[1 + i], hidden_size, hidden_size))
    params["blocks"].append(block_params(keys[depth + 1], hidden_size, out_channels))  # last
    params["cls_w"] = _xavier(keys[depth + 2], out_channels, class_num)
    params["cls_b"] = jnp.zeros((class_num,), jnp.float32)
    return params


# ---------------------------------------------------------------------------
if __name__ == "__main__":
    # Small shapes consistent with the module (out_channels == hidden_size as
    # the torch model requires).  Flattened D_in = 4*4*4 = 64.
    B = 2
    input_size = 4
    in_channels = 4
    hidden_size = 32
    out_channels = 32
    depth = 2
    class_num = 16

    key = jax.random.PRNGKey(0)
    k_params, k_x = jax.random.split(key)

    params = make_params(
        k_params,
        input_size=input_size, in_channels=in_channels,
        hidden_size=hidden_size, out_channels=out_channels,
        depth=depth, class_num=class_num,
    )

    x = jax.random.normal(k_x, (B, in_channels, input_size, input_size),
                          dtype=jnp.float32)

    # Main path: bf16 MXU operands (production setting).
    out = resnet1d_classifier_forward(params, x)
    out = jax.block_until_ready(out)
    assert out.shape == (B, class_num), out.shape
    assert bool(jnp.all(jnp.isfinite(out)))

    # Parity check of the exact-f32 kernel path against a pure-JAX reference.
    out_f32 = jax.block_until_ready(
        resnet1d_classifier_forward(params, x, mxu_dtype=jnp.float32))
    ref = jax.block_until_ready(reference_forward(params, x))
    assert jnp.allclose(out_f32, ref, rtol=5e-3, atol=5e-3), (
        float(jnp.max(jnp.abs(out_f32 - ref))))

    print("KERNEL_OK")
</pallas_src>

<mosaic_0001>
module attributes {stable_mosaic.version = 11 : i64} {
  func.func @staged_kernel(%arg0: i32, %arg1: i32, %arg2: memref<8x64xbf16, #tpu.memory_space<vmem>>, %arg3: memref<64x32xbf16, #tpu.memory_space<vmem>>, %arg4: memref<1x32xf32, #tpu.memory_space<vmem>>, %arg5: memref<32x32xbf16, #tpu.memory_space<vmem>>, %arg6: memref<1x32xf32, #tpu.memory_space<vmem>>, %arg7: memref<1x32x32xbf16, #tpu.memory_space<vmem>>, %arg8: memref<1x1x32xf32, #tpu.memory_space<vmem>>, %arg9: memref<1x32x32xbf16, #tpu.memory_space<vmem>>, %arg10: memref<1x1x32xf32, #tpu.memory_space<vmem>>, %arg11: memref<32x128xbf16, #tpu.memory_space<vmem>>, %arg12: memref<1x128xf32, #tpu.memory_space<vmem>>, %arg13: memref<8x128xf32, #tpu.memory_space<vmem>>, %arg14: memref<8x32xf32, #tpu.memory_space<vmem>>) attributes {dimension_semantics = [#tpu.dimension_semantics<parallel>, #tpu.dimension_semantics<arbitrary>], iteration_bounds = array<i64: 1, 4>, scalar_prefetch = 0 : i64, scratch_operands = 1 : i64, tpu.core_type = #tpu.core_type<tc>, window_params = [{transform_indices = @transform_0, window_bounds = array<i64: 8, 64>}, {pipeline_mode = #tpu.pipeline_mode<synchronous>, transform_indices = @transform_1, window_bounds = array<i64: 64, 32>}, {pipeline_mode = #tpu.pipeline_mode<synchronous>, transform_indices = @transform_2, window_bounds = array<i64: 1, 32>}, {pipeline_mode = #tpu.pipeline_mode<synchronous>, transform_indices = @transform_3, window_bounds = array<i64: 32, 32>}, {pipeline_mode = #tpu.pipeline_mode<synchronous>, transform_indices = @transform_4, window_bounds = array<i64: 1, 32>}, {transform_indices = @transform_5, window_bounds = array<i64: 1, 32, 32>}, {transform_indices = @transform_6, window_bounds = array<i64: 1, 1, 32>}, {transform_indices = @transform_7, window_bounds = array<i64: 1, 32, 32>}, {transform_indices = @transform_8, window_bounds = array<i64: 1, 1, 32>}, {pipeline_mode = #tpu.pipeline_mode<synchronous>, transform_indices = @transform_9, window_bounds = array<i64: 32, 128>}, {pipeline_mode = #tpu.pipeline_mode<synchronous>, transform_indices = @transform_10, window_bounds = array<i64: 1, 128>}, {transform_indices = @transform_11, window_bounds = array<i64: 8, 128>}]} {
    %c0_i32 = arith.constant 0 : i32
    %0 = arith.cmpi eq, %arg1, %c0_i32 : i32
    %1 = arith.extui %0 : i1 to i32
    %c0_i32_0 = arith.constant 0 : i32
    %2 = arith.cmpi ne, %1, %c0_i32_0 : i32
    scf.if %2 {
      %c0 = arith.constant 0 : index
      %c0_4 = arith.constant 0 : index
      %9 = vector.load %arg2[%c0, %c0_4] : memref<8x64xbf16, #tpu.memory_space<vmem>>, vector<8x64xbf16>
      %10 = arith.extf %9 : vector<8x64xbf16> to vector<8x64xf32>
      %cst = arith.constant dense<0.000000e+00> : vector<8xf32>
      %11 = vector.multi_reduction <add>, %10, %cst [1] : vector<8x64xf32> to vector<8xf32>
      %12 = vector.shape_cast %11 : vector<8xf32> to vector<8x1xf32>
      %13 = arith.mulf %10, %10 : vector<8x64xf32>
      %cst_5 = arith.constant dense<0.000000e+00> : vector<8xf32>
      %14 = vector.multi_reduction <add>, %13, %cst_5 [1] : vector<8x64xf32> to vector<8xf32>
      %15 = vector.shape_cast %14 : vector<8xf32> to vector<8x1xf32>
      %cst_6 = arith.constant 1.562500e-02 : f32
      %16 = vector.broadcast %cst_6 : f32 to vector<8x1xf32>
      %17 = arith.mulf %12, %16 : vector<8x1xf32>
      %cst_7 = arith.constant 1.562500e-02 : f32
      %18 = vector.broadcast %cst_7 : f32 to vector<8x1xf32>
      %19 = arith.mulf %15, %18 : vector<8x1xf32>
      %20 = arith.mulf %17, %17 : vector<8x1xf32>
      %21 = arith.subf %19, %20 : vector<8x1xf32>
      %cst_8 = arith.constant 0.000000e+00 : f32
      %22 = vector.broadcast %cst_8 : f32 to vector<8x1xf32>
      %23 = arith.maximumf %21, %22 : vector<8x1xf32>
      %24 = vector.broadcast %17 : vector<8x1xf32> to vector<8x64xf32>
      %25 = arith.subf %10, %24 : vector<8x64xf32>
      %cst_9 = arith.constant 9.99999997E-7 : f32
      %26 = vector.broadcast %cst_9 : f32 to vector<8x1xf32>
      %27 = arith.addf %23, %26 : vector<8x1xf32>
      %28 = math.rsqrt %27 : vector<8x1xf32>
      %29 = vector.broadcast %28 : vector<8x1xf32> to vector<8x64xf32>
      %30 = arith.mulf %25, %29 : vector<8x64xf32>
      %cst_10 = arith.constant 5.000000e-01 : f32
      %31 = vector.broadcast %cst_10 : f32 to vector<8x64xf32>
      %32 = arith.mulf %31, %30 : vector<8x64xf32>
      %33 = math.tanh %32 : vector<8x64xf32>
      %cst_11 = arith.constant 5.000000e-01 : f32
      %34 = vector.broadcast %cst_11 : f32 to vector<8x64xf32>
      %35 = arith.mulf %34, %33 : vector<8x64xf32>
      %cst_12 = arith.constant 5.000000e-01 : f32
      %36 = vector.broadcast %cst_12 : f32 to vector<8x64xf32>
      %37 = arith.addf %36, %35 : vector<8x64xf32>
      %38 = arith.mulf %30, %37 : vector<8x64xf32>
      %39 = arith.truncf %38 : vector<8x64xf32> to vector<8x64xbf16>
      %c0_13 = arith.constant 0 : index
      %c0_14 = arith.constant 0 : index
      %40 = vector.load %arg3[%c0_13, %c0_14] : memref<64x32xbf16, #tpu.memory_space<vmem>>, vector<64x32xbf16>
      %cst_15 = arith.constant dense<0.000000e+00> : vector<8x32xf32>
      %41 = tpu.matmul %39, %40, %cst_15 {dimension_numbers = #tpu.dot_dimension_numbers<[1], [0], [0], [1], [0, 0, 1, 1], [], []>} : vector<8x64xbf16>, vector<64x32xbf16>, vector<8x32xf32> -> vector<8x32xf32>
      %c0_16 = arith.constant 0 : index
      %c0_17 = arith.constant 0 : index
      %42 = vector.load %arg4[%c0_16, %c0_17] : memref<1x32xf32, #tpu.memory_space<vmem>>, vector<1x32xf32>
      %43 = vector.broadcast %42 : vector<1x32xf32> to vector<8x32xf32>
      %44 = arith.addf %41, %43 : vector<8x32xf32>
      %cst_18 = arith.constant dense<0.000000e+00> : vector<8xf32>
      %45 = vector.multi_reduction <add>, %44, %cst_18 [1] : vector<8x32xf32> to vector<8xf32>
      %46 = vector.shape_cast %45 : vector<8xf32> to vector<8x1xf32>
      %47 = arith.mulf %44, %44 : vector<8x32xf32>
      %cst_19 = arith.constant dense<0.000000e+00> : vector<8xf32>
      %48 = vector.multi_reduction <add>, %47, %cst_19 [1] : vector<8x32xf32> to vector<8xf32>
      %49 = vector.shape_cast %48 : vector<8xf32> to vector<8x1xf32>
      %cst_20 = arith.constant 3.125000e-02 : f32
      %50 = vector.broadcast %cst_20 : f32 to vector<8x1xf32>
      %51 = arith.mulf %46, %50 : vector<8x1xf32>
      %cst_21 = arith.constant 3.125000e-02 : f32
      %52 = vector.broadcast %cst_21 : f32 to vector<8x1xf32>
      %53 = arith.mulf %49, %52 : vector<8x1xf32>
      %54 = arith.mulf %51, %51 : vector<8x1xf32>
      %55 = arith.subf %53, %54 : vector<8x1xf32>
      %cst_22 = arith.constant 0.000000e+00 : f32
      %56 = vector.broadcast %cst_22 : f32 to vector<8x1xf32>
      %57 = arith.maximumf %55, %56 : vector<8x1xf32>
      %58 = vector.broadcast %51 : vector<8x1xf32> to vector<8x32xf32>
      %59 = arith.subf %44, %58 : vector<8x32xf32>
      %cst_23 = arith.constant 9.99999997E-7 : f32
      %60 = vector.broadcast %cst_23 : f32 to vector<8x1xf32>
      %61 = arith.addf %57, %60 : vector<8x1xf32>
      %62 = math.rsqrt %61 : vector<8x1xf32>
      %63 = vector.broadcast %62 : vector<8x1xf32> to vector<8x32xf32>
      %64 = arith.mulf %59, %63 : vector<8x32xf32>
      %cst_24 = arith.constant 5.000000e-01 : f32
      %65 = vector.broadcast %cst_24 : f32 to vector<8x32xf32>
      %66 = arith.mulf %65, %64 : vector<8x32xf32>
      %67 = math.tanh %66 : vector<8x32xf32>
      %cst_25 = arith.constant 5.000000e-01 : f32
      %68 = vector.broadcast %cst_25 : f32 to vector<8x32xf32>
      %69 = arith.mulf %68, %67 : vector<8x32xf32>
      %cst_26 = arith.constant 5.000000e-01 : f32
      %70 = vector.broadcast %cst_26 : f32 to vector<8x32xf32>
      %71 = arith.addf %70, %69 : vector<8x32xf32>
      %72 = arith.mulf %64, %71 : vector<8x32xf32>
      %73 = arith.truncf %72 : vector<8x32xf32> to vector<8x32xbf16>
      %c0_27 = arith.constant 0 : index
      %c0_28 = arith.constant 0 : index
      %74 = vector.load %arg5[%c0_27, %c0_28] : memref<32x32xbf16, #tpu.memory_space<vmem>>, vector<32x32xbf16>
      %cst_29 = arith.constant dense<0.000000e+00> : vector<8x32xf32>
      %75 = tpu.matmul %73, %74, %cst_29 {dimension_numbers = #tpu.dot_dimension_numbers<[1], [0], [0], [1], [0, 0, 1, 1], [], []>} : vector<8x32xbf16>, vector<32x32xbf16>, vector<8x32xf32> -> vector<8x32xf32>
      %c0_30 = arith.constant 0 : index
      %c0_31 = arith.constant 0 : index
      %76 = vector.load %arg6[%c0_30, %c0_31] : memref<1x32xf32, #tpu.memory_space<vmem>>, vector<1x32xf32>
      %77 = vector.broadcast %76 : vector<1x32xf32> to vector<8x32xf32>
      %78 = arith.addf %75, %77 : vector<8x32xf32>
      %c0_32 = arith.constant 0 : index
      %c0_33 = arith.constant 0 : index
      %79 = vector.load %arg14[%c0_32, %c0_33] : memref<8x32xf32, #tpu.memory_space<vmem>>, vector<8x32xf32>
      tpu.vector_store %arg14[%c0_32, %c0_33], %78 {strides = array<i32>} : memref<8x32xf32, #tpu.memory_space<vmem>>, vector<8x32xf32>,
    } else {
    }
    %c0_i32_1 = arith.constant 0 : i32
    %3 = arith.cmpi sgt, %arg1, %c0_i32_1 : i32
    %4 = arith.extui %3 : i1 to i32
    %c0_i32_2 = arith.constant 0 : i32
    %5 = arith.cmpi ne, %4, %c0_i32_2 : i32
    scf.if %5 {
      %c0 = arith.constant 0 : index
      %c0_4 = arith.constant 0 : index
      %9 = vector.load %arg14[%c0, %c0_4] : memref<8x32xf32, #tpu.memory_space<vmem>>, vector<8x32xf32>
      %cst = arith.constant dense<0.000000e+00> : vector<8xf32>
      %10 = vector.multi_reduction <add>, %9, %cst [1] : vector<8x32xf32> to vector<8xf32>
      %11 = vector.shape_cast %10 : vector<8xf32> to vector<8x1xf32>
      %12 = arith.mulf %9, %9 : vector<8x32xf32>
      %cst_5 = arith.constant dense<0.000000e+00> : vector<8xf32>
      %13 = vector.multi_reduction <add>, %12, %cst_5 [1] : vector<8x32xf32> to vector<8xf32>
      %14 = vector.shape_cast %13 : vector<8xf32> to vector<8x1xf32>
      %cst_6 = arith.constant 3.125000e-02 : f32
      %15 = vector.broadcast %cst_6 : f32 to vector<8x1xf32>
      %16 = arith.mulf %11, %15 : vector<8x1xf32>
      %cst_7 = arith.constant 3.125000e-02 : f32
      %17 = vector.broadcast %cst_7 : f32 to vector<8x1xf32>
      %18 = arith.mulf %14, %17 : vector<8x1xf32>
      %19 = arith.mulf %16, %16 : vector<8x1xf32>
      %20 = arith.subf %18, %19 : vector<8x1xf32>
      %cst_8 = arith.constant 0.000000e+00 : f32
      %21 = vector.broadcast %cst_8 : f32 to vector<8x1xf32>
      %22 = arith.maximumf %20, %21 : vector<8x1xf32>
      %23 = vector.broadcast %16 : vector<8x1xf32> to vector<8x32xf32>
      %24 = arith.subf %9, %23 : vector<8x32xf32>
      %cst_9 = arith.constant 9.99999997E-7 : f32
      %25 = vector.broadcast %cst_9 : f32 to vector<8x1xf32>
      %26 = arith.addf %22, %25 : vector<8x1xf32>
      %27 = math.rsqrt %26 : vector<8x1xf32>
      %28 = vector.broadcast %27 : vector<8x1xf32> to vector<8x32xf32>
      %29 = arith.mulf %24, %28 : vector<8x32xf32>
      %cst_10 = arith.constant 5.000000e-01 : f32
      %30 = vector.broadcast %cst_10 : f32 to vector<8x32xf32>
      %31 = arith.mulf %30, %29 : vector<8x32xf32>
      %32 = math.tanh %31 : vector<8x32xf32>
      %cst_11 = arith.constant 5.000000e-01 : f32
      %33 = vector.broadcast %cst_11 : f32 to vector<8x32xf32>
      %34 = arith.mulf %33, %32 : vector<8x32xf32>
      %cst_12 = arith.constant 5.000000e-01 : f32
      %35 = vector.broadcast %cst_12 : f32 to vector<8x32xf32>
      %36 = arith.addf %35, %34 : vector<8x32xf32>
      %37 = arith.mulf %29, %36 : vector<8x32xf32>
      %38 = arith.truncf %37 : vector<8x32xf32> to vector<8x32xbf16>
      %c0_13 = arith.constant 0 : index
      %c0_14 = arith.constant 0 : index
      %c0_15 = arith.constant 0 : index
      %39 = vector.load %arg7[%c0_13, %c0_14, %c0_15] : memref<1x32x32xbf16, #tpu.memory_space<vmem>>, vector<1x32x32xbf16>
      %40 = vector.shape_cast %39 : vector<1x32x32xbf16> to vector<32x32xbf16>
      %cst_16 = arith.constant dense<0.000000e+00> : vector<8x32xf32>
      %41 = tpu.matmul %38, %40, %cst_16 {dimension_numbers = #tpu.dot_dimension_numbers<[1], [0], [0], [1], [0, 0, 1, 1], [], []>} : vector<8x32xbf16>, vector<32x32xbf16>, vector<8x32xf32> -> vector<8x32xf32>
      %c0_17 = arith.constant 0 : index
      %c0_18 = arith.constant 0 : index
      %c0_19 = arith.constant 0 : index
      %42 = vector.load %arg8[%c0_17, %c0_18, %c0_19] : memref<1x1x32xf32, #tpu.memory_space<vmem>>, vector<1x1x32xf32>
      %43 = vector.shape_cast %42 : vector<1x1x32xf32> to vector<1x32xf32>
      %44 = vector.broadcast %43 : vector<1x32xf32> to vector<8x32xf32>
      %45 = arith.addf %41, %44 : vector<8x32xf32>
      %cst_20 = arith.constant dense<0.000000e+00> : vector<8xf32>
      %46 = vector.multi_reduction <add>, %45, %cst_20 [1] : vector<8x32xf32> to vector<8xf32>
      %47 = vector.shape_cast %46 : vector<8xf32> to vector<8x1xf32>
      %48 = arith.mulf %45, %45 : vector<8x32xf32>
      %cst_21 = arith.constant dense<0.000000e+00> : vector<8xf32>
      %49 = vector.multi_reduction <add>, %48, %cst_21 [1] : vector<8x32xf32> to vector<8xf32>
      %50 = vector.shape_cast %49 : vector<8xf32> to vector<8x1xf32>
      %cst_22 = arith.constant 3.125000e-02 : f32
      %51 = vector.broadcast %cst_22 : f32 to vector<8x1xf32>
      %52 = arith.mulf %47, %51 : vector<8x1xf32>
      %cst_23 = arith.constant 3.125000e-02 : f32
      %53 = vector.broadcast %cst_23 : f32 to vector<8x1xf32>
      %54 = arith.mulf %50, %53 : vector<8x1xf32>
      %55 = arith.mulf %52, %52 : vector<8x1xf32>
      %56 = arith.subf %54, %55 : vector<8x1xf32>
      %cst_24 = arith.constant 0.000000e+00 : f32
      %57 = vector.broadcast %cst_24 : f32 to vector<8x1xf32>
      %58 = arith.maximumf %56, %57 : vector<8x1xf32>
      %59 = vector.broadcast %52 : vector<8x1xf32> to vector<8x32xf32>
      %60 = arith.subf %45, %59 : vector<8x32xf32>
      %cst_25 = arith.constant 9.99999997E-7 : f32
      %61 = vector.broadcast %cst_25 : f32 to vector<8x1xf32>
      %62 = arith.addf %58, %61 : vector<8x1xf32>
      %63 = math.rsqrt %62 : vector<8x1xf32>
      %64 = vector.broadcast %63 : vector<8x1xf32> to vector<8x32xf32>
      %65 = arith.mulf %60, %64 : vector<8x32xf32>
      %cst_26 = arith.constant 5.000000e-01 : f32
      %66 = vector.broadcast %cst_26 : f32 to vector<8x32xf32>
      %67 = arith.mulf %66, %65 : vector<8x32xf32>
      %68 = math.tanh %67 : vector<8x32xf32>
      %cst_27 = arith.constant 5.000000e-01 : f32
      %69 = vector.broadcast %cst_27 : f32 to vector<8x32xf32>
      %70 = arith.mulf %69, %68 : vector<8x32xf32>
      %cst_28 = arith.constant 5.000000e-01 : f32
      %71 = vector.broadcast %cst_28 : f32 to vector<8x32xf32>
      %72 = arith.addf %71, %70 : vector<8x32xf32>
      %73 = arith.mulf %65, %72 : vector<8x32xf32>
      %74 = arith.truncf %73 : vector<8x32xf32> to vector<8x32xbf16>
      %c0_29 = arith.constant 0 : index
      %c0_30 = arith.constant 0 : index
      %c0_31 = arith.constant 0 : index
      %75 = vector.load %arg9[%c0_29, %c0_30, %c0_31] : memref<1x32x32xbf16, #tpu.memory_space<vmem>>, vector<1x32x32xbf16>
      %76 = vector.shape_cast %75 : vector<1x32x32xbf16> to vector<32x32xbf16>
      %cst_32 = arith.constant dense<0.000000e+00> : vector<8x32xf32>
      %77 = tpu.matmul %74, %76, %cst_32 {dimension_numbers = #tpu.dot_dimension_numbers<[1], [0], [0], [1], [0, 0, 1, 1], [], []>} : vector<8x32xbf16>, vector<32x32xbf16>, vector<8x32xf32> -> vector<8x32xf32>
      %c0_33 = arith.constant 0 : index
      %c0_34 = arith.constant 0 : index
      %c0_35 = arith.constant 0 : index
      %78 = vector.load %arg10[%c0_33, %c0_34, %c0_35] : memref<1x1x32xf32, #tpu.memory_space<vmem>>, vector<1x1x32xf32>
      %79 = vector.shape_cast %78 : vector<1x1x32xf32> to vector<1x32xf32>
      %80 = vector.broadcast %79 : vector<1x32xf32> to vector<8x32xf32>
      %81 = arith.addf %77, %80 : vector<8x32xf32>
      %82 = arith.addf %9, %81 : vector<8x32xf32>
      %c0_36 = arith.constant 0 : index
      %c0_37 = arith.constant 0 : index
      %83 = vector.load %arg14[%c0_36, %c0_37] : memref<8x32xf32, #tpu.memory_space<vmem>>, vector<8x32xf32>
      tpu.vector_store %arg14[%c0_36, %c0_37], %82 {strides = array<i32>} : memref<8x32xf32, #tpu.memory_space<vmem>>, vector<8x32xf32>,
    } else {
    }
    %c3_i32 = arith.constant 3 : i32
    %6 = arith.cmpi eq, %arg1, %c3_i32 : i32
    %7 = arith.extui %6 : i1 to i32
    %c0_i32_3 = arith.constant 0 : i32
    %8 = arith.cmpi ne, %7, %c0_i32_3 : i32
    scf.if %8 {
      %c0 = arith.constant 0 : index
      %c0_4 = arith.constant 0 : index
      %9 = vector.load %arg14[%c0, %c0_4] : memref<8x32xf32, #tpu.memory_space<vmem>>, vector<8x32xf32>
      %10 = arith.truncf %9 : vector<8x32xf32> to vector<8x32xbf16>
      %c0_5 = arith.constant 0 : index
      %c0_6 = arith.constant 0 : index
      %11 = vector.load %arg11[%c0_5, %c0_6] : memref<32x128xbf16, #tpu.memory_space<vmem>>, vector<32x128xbf16>
      %cst = arith.constant dense<0.000000e+00> : vector<8x128xf32>
      %12 = tpu.matmul %10, %11, %cst {dimension_numbers = #tpu.dot_dimension_numbers<[1], [0], [0], [1], [0, 0, 1, 1], [], []>} : vector<8x32xbf16>, vector<32x128xbf16>, vector<8x128xf32> -> vector<8x128xf32>
      %c0_7 = arith.constant 0 : index
      %c0_8 = arith.constant 0 : index
      %13 = vector.load %arg12[%c0_7, %c0_8] : memref<1x128xf32, #tpu.memory_space<vmem>>, vector<1x128xf32>
      %14 = vector.broadcast %13 : vector<1x128xf32> to vector<8x128xf32>
      %15 = arith.addf %12, %14 : vector<8x128xf32>
      %c0_9 = arith.constant 0 : index
      %c0_10 = arith.constant 0 : index
      %16 = vector.load %arg13[%c0_9, %c0_10] : memref<8x128xf32, #tpu.memory_space<vmem>>, vector<8x128xf32>
      tpu.vector_store %arg13[%c0_9, %c0_10], %15 {strides = array<i32>} : memref<8x128xf32, #tpu.memory_space<vmem>>, vector<8x128xf32>,
    } else {
    }
    return
  }
  func.func @transform_0(%arg0: i32, %arg1: i32) -> (i32, i32) {
    %c0_i32 = arith.constant 0 : i32
    %c0_i32_0 = arith.constant 0 : i32
    return %arg0, %c0_i32 : i32, i32
  }
  func.func @transform_1(%arg0: i32, %arg1: i32) -> (i32, i32) {
    %c0_i32 = arith.constant 0 : i32
    %c0_i32_0 = arith.constant 0 : i32
    %c0_i32_1 = arith.constant 0 : i32
    return %c0_i32, %c0_i32_0 : i32, i32
  }
  func.func @transform_2(%arg0: i32, %arg1: i32) -> (i32, i32) {
    %c0_i32 = arith.constant 0 : i32
    %c0_i32_0 = arith.constant 0 : i32
    %c0_i32_1 = arith.constant 0 : i32
    return %c0_i32, %c0_i32_0 : i32, i32
  }
  func.func @transform_3(%arg0: i32, %arg1: i32) -> (i32, i32) {
    %c0_i32 = arith.constant 0 : i32
    %c0_i32_0 = arith.constant 0 : i32
    %c0_i32_1 = arith.constant 0 : i32
    return %c0_i32, %c0_i32_0 : i32, i32
  }
  func.func @transform_4(%arg0: i32, %arg1: i32) -> (i32, i32) {
    %c0_i32 = arith.constant 0 : i32
    %c0_i32_0 = arith.constant 0 : i32
    %c0_i32_1 = arith.constant 0 : i32
    return %c0_i32, %c0_i32_0 : i32, i32
  }
  func.func @transform_5(%arg0: i32, %arg1: i32) -> (i32, i32, i32) {
    %c1_i32 = arith.constant 1 : i32
    %0 = arith.subi %arg1, %c1_i32 : i32
    %c0_i32 = arith.constant 0 : i32
    %1 = arith.maxsi %0, %c0_i32 : i32
    %c0_i32_0 = arith.constant 0 : i32
    %c0_i32_1 = arith.constant 0 : i32
    %c0_i32_2 = arith.constant 0 : i32
    return %1, %c0_i32_0, %c0_i32_1 : i32, i32, i32
  }
  func.func @transform_6(%arg0: i32, %arg1: i32) -> (i32, i32, i32) {
    %c1_i32 = arith.constant 1 : i32
    %0 = arith.subi %arg1, %c1_i32 : i32
    %c0_i32 = arith.constant 0 : i32
    %1 = arith.maxsi %0, %c0_i32 : i32
    %c0_i32_0 = arith.constant 0 : i32
    %c0_i32_1 = arith.constant 0 : i32
    %c0_i32_2 = arith.constant 0 : i32
    return %1, %c0_i32_0, %c0_i32_1 : i32, i32, i32
  }
  func.func @transform_7(%arg0: i32, %arg1: i32) -> (i32, i32, i32) {
    %c1_i32 = arith.constant 1 : i32
    %0 = arith.subi %arg1, %c1_i32 : i32
    %c0_i32 = arith.constant 0 : i32
    %1 = arith.maxsi %0, %c0_i32 : i32
    %c0_i32_0 = arith.constant 0 : i32
    %c0_i32_1 = arith.constant 0 : i32
    %c0_i32_2 = arith.constant 0 : i32
    return %1, %c0_i32_0, %c0_i32_1 : i32, i32, i32
  }
  func.func @transform_8(%arg0: i32, %arg1: i32) -> (i32, i32, i32) {
    %c1_i32 = arith.constant 1 : i32
    %0 = arith.subi %arg1, %c1_i32 : i32
    %c0_i32 = arith.constant 0 : i32
    %1 = arith.maxsi %0, %c0_i32 : i32
    %c0_i32_0 = arith.constant 0 : i32
    %c0_i32_1 = arith.constant 0 : i32
    %c0_i32_2 = arith.constant 0 : i32
    return %1, %c0_i32_0, %c0_i32_1 : i32, i32, i32
  }
  func.func @transform_9(%arg0: i32, %arg1: i32) -> (i32, i32) {
    %c0_i32 = arith.constant 0 : i32
    %c0_i32_0 = arith.constant 0 : i32
    %c0_i32_1 = arith.constant 0 : i32
    return %c0_i32, %c0_i32_0 : i32, i32
  }
  func.func @transform_10(%arg0: i32, %arg1: i32) -> (i32, i32) {
    %c0_i32 = arith.constant 0 : i32
    %c0_i32_0 = arith.constant 0 : i32
    %c0_i32_1 = arith.constant 0 : i32
    return %c0_i32, %c0_i32_0 : i32, i32
  }
  func.func @transform_11(%arg0: i32, %arg1: i32) -> (i32, i32) {
    %c0_i32 = arith.constant 0 : i32
    %c0_i32_0 = arith.constant 0 : i32
    return %arg0, %c0_i32 : i32, i32
  }
}

module attributes {stable_mosaic.version = 11 : i64} {
  func.func @staged_kernel(%arg0: i32, %arg1: i32, %arg2: memref<8x64xbf16, #tpu.memory_space<vmem>>, %arg3: memref<64x32xbf16, #tpu.memory_space<vmem>>, %arg4: memref<1x32xf32, #tpu.memory_space<vmem>>, %arg5: memref<32x32xbf16, #tpu.memory_space<vmem>>, %arg6: memref<1x32xf32, #tpu.memory_space<vmem>>, %arg7: memref<1x32x32xbf16, #tpu.memory_space<vmem>>, %arg8: memref<1x1x32xf32, #tpu.memory_space<vmem>>, %arg9: memref<1x32x32xbf16, #tpu.memory_space<vmem>>, %arg10: memref<1x1x32xf32, #tpu.memory_space<vmem>>, %arg11: memref<32x128xbf16, #tpu.memory_space<vmem>>, %arg12: memref<1x128xf32, #tpu.memory_space<vmem>>, %arg13: memref<8x128xf32, #tpu.memory_space<vmem>>, %arg14: memref<8x32xf32, #tpu.memory_space<vmem>>) attributes {dimension_semantics = [#tpu.dimension_semantics<parallel>, #tpu.dimension_semantics<arbitrary>], iteration_bounds = array<i64: 1, 4>, scalar_prefetch = 0 : i64, scratch_operands = 1 : i64, tpu.core_type = #tpu.core_type<tc>, window_params = [{transform_indices = @transform_0, window_bounds = array<i64: 8, 64>}, {pipeline_mode = #tpu.pipeline_mode<synchronous>, transform_indices = @transform_1, window_bounds = array<i64: 64, 32>}, {pipeline_mode = #tpu.pipeline_mode<synchronous>, transform_indices = @transform_2, window_bounds = array<i64: 1, 32>}, {pipeline_mode = #tpu.pipeline_mode<synchronous>, transform_indices = @transform_3, window_bounds = array<i64: 32, 32>}, {pipeline_mode = #tpu.pipeline_mode<synchronous>, transform_indices = @transform_4, window_bounds = array<i64: 1, 32>}, {transform_indices = @transform_5, window_bounds = array<i64: 1, 32, 32>}, {transform_indices = @transform_6, window_bounds = array<i64: 1, 1, 32>}, {transform_indices = @transform_7, window_bounds = array<i64: 1, 32, 32>}, {transform_indices = @transform_8, window_bounds = array<i64: 1, 1, 32>}, {pipeline_mode = #tpu.pipeline_mode<synchronous>, transform_indices = @transform_9, window_bounds = array<i64: 32, 128>}, {pipeline_mode = #tpu.pipeline_mode<synchronous>, transform_indices = @transform_10, window_bounds = array<i64: 1, 128>}, {transform_indices = @transform_11, window_bounds = array<i64: 8, 128>}]} {
    %c0_i32 = arith.constant 0 : i32
    %0 = arith.cmpi eq, %arg1, %c0_i32 : i32
    %1 = arith.extui %0 : i1 to i32
    %c0_i32_0 = arith.constant 0 : i32
    %2 = arith.cmpi ne, %1, %c0_i32_0 : i32
    scf.if %2 {
      %c0 = arith.constant 0 : index
      %c0_4 = arith.constant 0 : index
      %9 = vector.load %arg2[%c0, %c0_4] : memref<8x64xbf16, #tpu.memory_space<vmem>>, vector<8x64xbf16>
      %10 = arith.extf %9 : vector<8x64xbf16> to vector<8x64xf32>
      %cst = arith.constant dense<0.000000e+00> : vector<8xf32>
      %11 = vector.multi_reduction <add>, %10, %cst [1] : vector<8x64xf32> to vector<8xf32>
      %12 = vector.shape_cast %11 : vector<8xf32> to vector<8x1xf32>
      %13 = arith.mulf %10, %10 : vector<8x64xf32>
      %cst_5 = arith.constant dense<0.000000e+00> : vector<8xf32>
      %14 = vector.multi_reduction <add>, %13, %cst_5 [1] : vector<8x64xf32> to vector<8xf32>
      %15 = vector.shape_cast %14 : vector<8xf32> to vector<8x1xf32>
      %cst_6 = arith.constant 1.562500e-02 : f32
      %16 = vector.broadcast %cst_6 : f32 to vector<8x1xf32>
      %17 = arith.mulf %12, %16 : vector<8x1xf32>
      %cst_7 = arith.constant 1.562500e-02 : f32
      %18 = vector.broadcast %cst_7 : f32 to vector<8x1xf32>
      %19 = arith.mulf %15, %18 : vector<8x1xf32>
      %20 = arith.mulf %17, %17 : vector<8x1xf32>
      %21 = arith.subf %19, %20 : vector<8x1xf32>
      %cst_8 = arith.constant 0.000000e+00 : f32
      %22 = vector.broadcast %cst_8 : f32 to vector<8x1xf32>
      %23 = arith.maximumf %21, %22 : vector<8x1xf32>
      %24 = vector.broadcast %17 : vector<8x1xf32> to vector<8x64xf32>
      %25 = arith.subf %10, %24 : vector<8x64xf32>
      %cst_9 = arith.constant 9.99999997E-7 : f32
      %26 = vector.broadcast %cst_9 : f32 to vector<8x1xf32>
      %27 = arith.addf %23, %26 : vector<8x1xf32>
      %28 = math.rsqrt %27 : vector<8x1xf32>
      %29 = vector.broadcast %28 : vector<8x1xf32> to vector<8x64xf32>
      %30 = arith.mulf %25, %29 : vector<8x64xf32>
      %cst_10 = arith.constant 5.000000e-01 : f32
      %31 = vector.broadcast %cst_10 : f32 to vector<8x64xf32>
      %32 = arith.mulf %31, %30 : vector<8x64xf32>
      %33 = math.tanh %32 : vector<8x64xf32>
      %cst_11 = arith.constant 5.000000e-01 : f32
      %34 = vector.broadcast %cst_11 : f32 to vector<8x64xf32>
      %35 = arith.mulf %34, %33 : vector<8x64xf32>
      %cst_12 = arith.constant 5.000000e-01 : f32
      %36 = vector.broadcast %cst_12 : f32 to vector<8x64xf32>
      %37 = arith.addf %36, %35 : vector<8x64xf32>
      %38 = arith.mulf %30, %37 : vector<8x64xf32>
      %39 = arith.truncf %38 : vector<8x64xf32> to vector<8x64xbf16>
      %c0_13 = arith.constant 0 : index
      %c0_14 = arith.constant 0 : index
      %40 = vector.load %arg3[%c0_13, %c0_14] : memref<64x32xbf16, #tpu.memory_space<vmem>>, vector<64x32xbf16>
      %cst_15 = arith.constant dense<0.000000e+00> : vector<8x32xf32>
      %41 = tpu.matmul %39, %40, %cst_15 {dimension_numbers = #tpu.dot_dimension_numbers<[1], [0], [0], [1], [0, 0, 1, 1], [], []>} : vector<8x64xbf16>, vector<64x32xbf16>, vector<8x32xf32> -> vector<8x32xf32>
      %c0_16 = arith.constant 0 : index
      %c0_17 = arith.constant 0 : index
      %42 = vector.load %arg4[%c0_16, %c0_17] : memref<1x32xf32, #tpu.memory_space<vmem>>, vector<1x32xf32>
      %43 = vector.broadcast %42 : vector<1x32xf32> to vector<8x32xf32>
      %44 = arith.addf %41, %43 : vector<8x32xf32>
      %cst_18 = arith.constant dense<0.000000e+00> : vector<8xf32>
      %45 = vector.multi_reduction <add>, %44, %cst_18 [1] : vector<8x32xf32> to vector<8xf32>
      %46 = vector.shape_cast %45 : vector<8xf32> to vector<8x1xf32>
      %47 = arith.mulf %44, %44 : vector<8x32xf32>
      %cst_19 = arith.constant dense<0.000000e+00> : vector<8xf32>
      %48 = vector.multi_reduction <add>, %47, %cst_19 [1] : vector<8x32xf32> to vector<8xf32>
      %49 = vector.shape_cast %48 : vector<8xf32> to vector<8x1xf32>
      %cst_20 = arith.constant 3.125000e-02 : f32
      %50 = vector.broadcast %cst_20 : f32 to vector<8x1xf32>
      %51 = arith.mulf %46, %50 : vector<8x1xf32>
      %cst_21 = arith.constant 3.125000e-02 : f32
      %52 = vector.broadcast %cst_21 : f32 to vector<8x1xf32>
      %53 = arith.mulf %49, %52 : vector<8x1xf32>
      %54 = arith.mulf %51, %51 : vector<8x1xf32>
      %55 = arith.subf %53, %54 : vector<8x1xf32>
      %cst_22 = arith.constant 0.000000e+00 : f32
      %56 = vector.broadcast %cst_22 : f32 to vector<8x1xf32>
      %57 = arith.maximumf %55, %56 : vector<8x1xf32>
      %58 = vector.broadcast %51 : vector<8x1xf32> to vector<8x32xf32>
      %59 = arith.subf %44, %58 : vector<8x32xf32>
      %cst_23 = arith.constant 9.99999997E-7 : f32
      %60 = vector.broadcast %cst_23 : f32 to vector<8x1xf32>
      %61 = arith.addf %57, %60 : vector<8x1xf32>
      %62 = math.rsqrt %61 : vector<8x1xf32>
      %63 = vector.broadcast %62 : vector<8x1xf32> to vector<8x32xf32>
      %64 = arith.mulf %59, %63 : vector<8x32xf32>
      %cst_24 = arith.constant 5.000000e-01 : f32
      %65 = vector.broadcast %cst_24 : f32 to vector<8x32xf32>
      %66 = arith.mulf %65, %64 : vector<8x32xf32>
      %67 = math.tanh %66 : vector<8x32xf32>
      %cst_25 = arith.constant 5.000000e-01 : f32
      %68 = vector.broadcast %cst_25 : f32 to vector<8x32xf32>
      %69 = arith.mulf %68, %67 : vector<8x32xf32>
      %cst_26 = arith.constant 5.000000e-01 : f32
      %70 = vector.broadcast %cst_26 : f32 to vector<8x32xf32>
      %71 = arith.addf %70, %69 : vector<8x32xf32>
      %72 = arith.mulf %64, %71 : vector<8x32xf32>
      %73 = arith.truncf %72 : vector<8x32xf32> to vector<8x32xbf16>
      %c0_27 = arith.constant 0 : index
      %c0_28 = arith.constant 0 : index
      %74 = vector.load %arg5[%c0_27, %c0_28] : memref<32x32xbf16, #tpu.memory_space<vmem>>, vector<32x32xbf16>
      %cst_29 = arith.constant dense<0.000000e+00> : vector<8x32xf32>
      %75 = tpu.matmul %73, %74, %cst_29 {dimension_numbers = #tpu.dot_dimension_numbers<[1], [0], [0], [1], [0, 0, 1, 1], [], []>} : vector<8x32xbf16>, vector<32x32xbf16>, vector<8x32xf32> -> vector<8x32xf32>
      %c0_30 = arith.constant 0 : index
      %c0_31 = arith.constant 0 : index
      %76 = vector.load %arg6[%c0_30, %c0_31] : memref<1x32xf32, #tpu.memory_space<vmem>>, vector<1x32xf32>
      %77 = vector.broadcast %76 : vector<1x32xf32> to vector<8x32xf32>
      %78 = arith.addf %75, %77 : vector<8x32xf32>
      %c0_32 = arith.constant 0 : index
      %c0_33 = arith.constant 0 : index
      %79 = vector.load %arg14[%c0_32, %c0_33] : memref<8x32xf32, #tpu.memory_space<vmem>>, vector<8x32xf32>
      tpu.vector_store %arg14[%c0_32, %c0_33], %78 {strides = array<i32>} : memref<8x32xf32, #tpu.memory_space<vmem>>, vector<8x32xf32>,
    } else {
    }
    %c0_i32_1 = arith.constant 0 : i32
    %3 = arith.cmpi sgt, %arg1, %c0_i32_1 : i32
    %4 = arith.extui %3 : i1 to i32
    %c0_i32_2 = arith.constant 0 : i32
    %5 = arith.cmpi ne, %4, %c0_i32_2 : i32
    scf.if %5 {
      %c0 = arith.constant 0 : index
      %c0_4 = arith.constant 0 : index
      %9 = vector.load %arg14[%c0, %c0_4] : memref<8x32xf32, #tpu.memory_space<vmem>>, vector<8x32xf32>
      %cst = arith.constant dense<0.000000e+00> : vector<8xf32>
      %10 = vector.multi_reduction <add>, %9, %cst [1] : vector<8x32xf32> to vector<8xf32>
      %11 = vector.shape_cast %10 : vector<8xf32> to vector<8x1xf32>
      %12 = arith.mulf %9, %9 : vector<8x32xf32>
      %cst_5 = arith.constant dense<0.000000e+00> : vector<8xf32>
      %13 = vector.multi_reduction <add>, %12, %cst_5 [1] : vector<8x32xf32> to vector<8xf32>
      %14 = vector.shape_cast %13 : vector<8xf32> to vector<8x1xf32>
      %cst_6 = arith.constant 3.125000e-02 : f32
      %15 = vector.broadcast %cst_6 : f32 to vector<8x1xf32>
      %16 = arith.mulf %11, %15 : vector<8x1xf32>
      %cst_7 = arith.constant 3.125000e-02 : f32
      %17 = vector.broadcast %cst_7 : f32 to vector<8x1xf32>
      %18 = arith.mulf %14, %17 : vector<8x1xf32>
      %19 = arith.mulf %16, %16 : vector<8x1xf32>
      %20 = arith.subf %18, %19 : vector<8x1xf32>
      %cst_8 = arith.constant 0.000000e+00 : f32
      %21 = vector.broadcast %cst_8 : f32 to vector<8x1xf32>
      %22 = arith.maximumf %20, %21 : vector<8x1xf32>
      %23 = vector.broadcast %16 : vector<8x1xf32> to vector<8x32xf32>
      %24 = arith.subf %9, %23 : vector<8x32xf32>
      %cst_9 = arith.constant 9.99999997E-7 : f32
      %25 = vector.broadcast %cst_9 : f32 to vector<8x1xf32>
      %26 = arith.addf %22, %25 : vector<8x1xf32>
      %27 = math.rsqrt %26 : vector<8x1xf32>
      %28 = vector.broadcast %27 : vector<8x1xf32> to vector<8x32xf32>
      %29 = arith.mulf %24, %28 : vector<8x32xf32>
      %cst_10 = arith.constant 5.000000e-01 : f32
      %30 = vector.broadcast %cst_10 : f32 to vector<8x32xf32>
      %31 = arith.mulf %30, %29 : vector<8x32xf32>
      %32 = math.tanh %31 : vector<8x32xf32>
      %cst_11 = arith.constant 5.000000e-01 : f32
      %33 = vector.broadcast %cst_11 : f32 to vector<8x32xf32>
      %34 = arith.mulf %33, %32 : vector<8x32xf32>
      %cst_12 = arith.constant 5.000000e-01 : f32
      %35 = vector.broadcast %cst_12 : f32 to vector<8x32xf32>
      %36 = arith.addf %35, %34 : vector<8x32xf32>
      %37 = arith.mulf %29, %36 : vector<8x32xf32>
      %38 = arith.truncf %37 : vector<8x32xf32> to vector<8x32xbf16>
      %c0_13 = arith.constant 0 : index
      %c0_14 = arith.constant 0 : index
      %c0_15 = arith.constant 0 : index
      %39 = vector.load %arg7[%c0_13, %c0_14, %c0_15] : memref<1x32x32xbf16, #tpu.memory_space<vmem>>, vector<1x32x32xbf16>
      %40 = vector.shape_cast %39 : vector<1x32x32xbf16> to vector<32x32xbf16>
      %cst_16 = arith.constant dense<0.000000e+00> : vector<8x32xf32>
      %41 = tpu.matmul %38, %40, %cst_16 {dimension_numbers = #tpu.dot_dimension_numbers<[1], [0], [0], [1], [0, 0, 1, 1], [], []>} : vector<8x32xbf16>, vector<32x32xbf16>, vector<8x32xf32> -> vector<8x32xf32>
      %c0_17 = arith.constant 0 : index
      %c0_18 = arith.constant 0 : index
      %c0_19 = arith.constant 0 : index
      %42 = vector.load %arg8[%c0_17, %c0_18, %c0_19] : memref<1x1x32xf32, #tpu.memory_space<vmem>>, vector<1x1x32xf32>
      %43 = vector.shape_cast %42 : vector<1x1x32xf32> to vector<1x32xf32>
      %44 = vector.broadcast %43 : vector<1x32xf32> to vector<8x32xf32>
      %45 = arith.addf %41, %44 : vector<8x32xf32>
      %cst_20 = arith.constant dense<0.000000e+00> : vector<8xf32>
      %46 = vector.multi_reduction <add>, %45, %cst_20 [1] : vector<8x32xf32> to vector<8xf32>
      %47 = vector.shape_cast %46 : vector<8xf32> to vector<8x1xf32>
      %48 = arith.mulf %45, %45 : vector<8x32xf32>
      %cst_21 = arith.constant dense<0.000000e+00> : vector<8xf32>
      %49 = vector.multi_reduction <add>, %48, %cst_21 [1] : vector<8x32xf32> to vector<8xf32>
      %50 = vector.shape_cast %49 : vector<8xf32> to vector<8x1xf32>
      %cst_22 = arith.constant 3.125000e-02 : f32
      %51 = vector.broadcast %cst_22 : f32 to vector<8x1xf32>
      %52 = arith.mulf %47, %51 : vector<8x1xf32>
      %cst_23 = arith.constant 3.125000e-02 : f32
      %53 = vector.broadcast %cst_23 : f32 to vector<8x1xf32>
      %54 = arith.mulf %50, %53 : vector<8x1xf32>
      %55 = arith.mulf %52, %52 : vector<8x1xf32>
      %56 = arith.subf %54, %55 : vector<8x1xf32>
      %cst_24 = arith.constant 0.000000e+00 : f32
      %57 = vector.broadcast %cst_24 : f32 to vector<8x1xf32>
      %58 = arith.maximumf %56, %57 : vector<8x1xf32>
      %59 = vector.broadcast %52 : vector<8x1xf32> to vector<8x32xf32>
      %60 = arith.subf %45, %59 : vector<8x32xf32>
      %cst_25 = arith.constant 9.99999997E-7 : f32
      %61 = vector.broadcast %cst_25 : f32 to vector<8x1xf32>
      %62 = arith.addf %58, %61 : vector<8x1xf32>
      %63 = math.rsqrt %62 : vector<8x1xf32>
      %64 = vector.broadcast %63 : vector<8x1xf32> to vector<8x32xf32>
      %65 = arith.mulf %60, %64 : vector<8x32xf32>
      %cst_26 = arith.constant 5.000000e-01 : f32
      %66 = vector.broadcast %cst_26 : f32 to vector<8x32xf32>
      %67 = arith.mulf %66, %65 : vector<8x32xf32>
      %68 = math.tanh %67 : vector<8x32xf32>
      %cst_27 = arith.constant 5.000000e-01 : f32
      %69 = vector.broadcast %cst_27 : f32 to vector<8x32xf32>
      %70 = arith.mulf %69, %68 : vector<8x32xf32>
      %cst_28 = arith.constant 5.000000e-01 : f32
      %71 = vector.broadcast %cst_28 : f32 to vector<8x32xf32>
      %72 = arith.addf %71, %70 : vector<8x32xf32>
      %73 = arith.mulf %65, %72 : vector<8x32xf32>
      %74 = arith.truncf %73 : vector<8x32xf32> to vector<8x32xbf16>
      %c0_29 = arith.constant 0 : index
      %c0_30 = arith.constant 0 : index
      %c0_31 = arith.constant 0 : index
      %75 = vector.load %arg9[%c0_29, %c0_30, %c0_31] : memref<1x32x32xbf16, #tpu.memory_space<vmem>>, vector<1x32x32xbf16>
      %76 = vector.shape_cast %75 : vector<1x32x32xbf16> to vector<32x32xbf16>
      %cst_32 = arith.constant dense<0.000000e+00> : vector<8x32xf32>
      %77 = tpu.matmul %74, %76, %cst_32 {dimension_numbers = #tpu.dot_dimension_numbers<[1], [0], [0], [1], [0, 0, 1, 1], [], []>} : vector<8x32xbf16>, vector<32x32xbf16>, vector<8x32xf32> -> vector<8x32xf32>
      %c0_33 = arith.constant 0 : index
      %c0_34 = arith.constant 0 : index
      %c0_35 = arith.constant 0 : index
      %78 = vector.load %arg10[%c0_33, %c0_34, %c0_35] : memref<1x1x32xf32, #tpu.memory_space<vmem>>, vector<1x1x32xf32>
      %79 = vector.shape_cast %78 : vector<1x1x32xf32> to vector<1x32xf32>
      %80 = vector.broadcast %79 : vector<1x32xf32> to vector<8x32xf32>
      %81 = arith.addf %77, %80 : vector<8x32xf32>
      %82 = arith.addf %9, %81 : vector<8x32xf32>
      %c0_36 = arith.constant 0 : index
      %c0_37 = arith.constant 0 : index
      %83 = vector.load %arg14[%c0_36, %c0_37] : memref<8x32xf32, #tpu.memory_space<vmem>>, vector<8x32xf32>
      tpu.vector_store %arg14[%c0_36, %c0_37], %82 {strides = array<i32>} : memref<8x32xf32, #tpu.memory_space<vmem>>, vector<8x32xf32>,
    } else {
    }
    %c3_i32 = arith.constant 3 : i32
    %6 = arith.cmpi eq, %arg1, %c3_i32 : i32
    %7 = arith.extui %6 : i1 to i32
    %c0_i32_3 = arith.constant 0 : i32
    %8 = arith.cmpi ne, %7, %c0_i32_3 : i32
    scf.if %8 {
      %c0 = arith.constant 0 : index
      %c0_4 = arith.constant 0 : index
      %9 = vector.load %arg14[%c0, %c0_4] : memref<8x32xf32, #tpu.memory_space<vmem>>, vector<8x32xf32>
      %10 = arith.truncf %9 : vector<8x32xf32> to vector<8x32xbf16>
      %c0_5 = arith.constant 0 : index
      %c0_6 = arith.constant 0 : index
      %11 = vector.load %arg11[%c0_5, %c0_6] : memref<32x128xbf16, #tpu.memory_space<vmem>>, vector<32x128xbf16>
      %cst = arith.constant dense<0.000000e+00> : vector<8x128xf32>
      %12 = tpu.matmul %10, %11, %cst {dimension_numbers = #tpu.dot_dimension_numbers<[1], [0], [0], [1], [0, 0, 1, 1], [], []>} : vector<8x32xbf16>, vector<32x128xbf16>, vector<8x128xf32> -> vector<8x128xf32>
      %c0_7 = arith.constant 0 : index
      %c0_8 = arith.constant 0 : index
      %13 = vector.load %arg12[%c0_7, %c0_8] : memref<1x128xf32, #tpu.memory_space<vmem>>, vector<1x128xf32>
      %14 = vector.broadcast %13 : vector<1x128xf32> to vector<8x128xf32>
      %15 = arith.addf %12, %14 : vector<8x128xf32>
      %c0_9 = arith.constant 0 : index
      %c0_10 = arith.constant 0 : index
      %16 = vector.load %arg13[%c0_9, %c0_10] : memref<8x128xf32, #tpu.memory_space<vmem>>, vector<8x128xf32>
      tpu.vector_store %arg13[%c0_9, %c0_10], %15 {strides = array<i32>} : memref<8x128xf32, #tpu.memory_space<vmem>>, vector<8x128xf32>,
    } else {
    }
    return
  }
  func.func @transform_0(%arg0: i32, %arg1: i32) -> (i32, i32) {
    %c0_i32 = arith.constant 0 : i32
    %c0_i32_0 = arith.constant 0 : i32
    return %arg0, %c0_i32 : i32, i32
  }
  func.func @transform_1(%arg0: i32, %arg1: i32) -> (i32, i32) {
    %c0_i32 = arith.constant 0 : i32
    %c0_i32_0 = arith.constant 0 : i32
    %c0_i32_1 = arith.constant 0 : i32
    return %c0_i32, %c0_i32_0 : i32, i32
  }
  func.func @transform_2(%arg0: i32, %arg1: i32) -> (i32, i32) {
    %c0_i32 = arith.constant 0 : i32
    %c0_i32_0 = arith.constant 0 : i32
    %c0_i32_1 = arith.constant 0 : i32
    return %c0_i32, %c0_i32_0 : i32, i32
  }
  func.func @transform_3(%arg0: i32, %arg1: i32) -> (i32, i32) {
    %c0_i32 = arith.constant 0 : i32
    %c0_i32_0 = arith.constant 0 : i32
    %c0_i32_1 = arith.constant 0 : i32
    return %c0_i32, %c0_i32_0 : i32, i32
  }
  func.func @transform_4(%arg0: i32, %arg1: i32) -> (i32, i32) {
    %c0_i32 = arith.constant 0 : i32
    %c0_i32_0 = arith.constant 0 : i32
    %c0_i32_1 = arith.constant 0 : i32
    return %c0_i32, %c0_i32_0 : i32, i32
  }
  func.func @transform_5(%arg0: i32, %arg1: i32) -> (i32, i32, i32) {
    %c1_i32 = arith.constant 1 : i32
    %0 = arith.subi %arg1, %c1_i32 : i32
    %c0_i32 = arith.constant 0 : i32
    %1 = arith.maxsi %0, %c0_i32 : i32
    %c0_i32_0 = arith.constant 0 : i32
    %c0_i32_1 = arith.constant 0 : i32
    %c0_i32_2 = arith.constant 0 : i32
    return %1, %c0_i32_0, %c0_i32_1 : i32, i32, i32
  }
  func.func @transform_6(%arg0: i32, %arg1: i32) -> (i32, i32, i32) {
    %c1_i32 = arith.constant 1 : i32
    %0 = arith.subi %arg1, %c1_i32 : i32
    %c0_i32 = arith.constant 0 : i32
    %1 = arith.maxsi %0, %c0_i32 : i32
    %c0_i32_0 = arith.constant 0 : i32
    %c0_i32_1 = arith.constant 0 : i32
    %c0_i32_2 = arith.constant 0 : i32
    return %1, %c0_i32_0, %c0_i32_1 : i32, i32, i32
  }
  func.func @transform_7(%arg0: i32, %arg1: i32) -> (i32, i32, i32) {
    %c1_i32 = arith.constant 1 : i32
    %0 = arith.subi %arg1, %c1_i32 : i32
    %c0_i32 = arith.constant 0 : i32
    %1 = arith.maxsi %0, %c0_i32 : i32
    %c0_i32_0 = arith.constant 0 : i32
    %c0_i32_1 = arith.constant 0 : i32
    %c0_i32_2 = arith.constant 0 : i32
    return %1, %c0_i32_0, %c0_i32_1 : i32, i32, i32
  }
  func.func @transform_8(%arg0: i32, %arg1: i32) -> (i32, i32, i32) {
    %c1_i32 = arith.constant 1 : i32
    %0 = arith.subi %arg1, %c1_i32 : i32
    %c0_i32 = arith.constant 0 : i32
    %1 = arith.maxsi %0, %c0_i32 : i32
    %c0_i32_0 = arith.constant 0 : i32
    %c0_i32_1 = arith.constant 0 : i32
    %c0_i32_2 = arith.constant 0 : i32
    return %1, %c0_i32_0, %c0_i32_1 : i32, i32, i32
  }
  func.func @transform_9(%arg0: i32, %arg1: i32) -> (i32, i32) {
    %c0_i32 = arith.constant 0 : i32
    %c0_i32_0 = arith.constant 0 : i32
    %c0_i32_1 = arith.constant 0 : i32
    return %c0_i32, %c0_i32_0 : i32, i32
  }
  func.func @transform_10(%arg0: i32, %arg1: i32) -> (i32, i32) {
    %c0_i32 = arith.constant 0 : i32
    %c0_i32_0 = arith.constant 0 : i32
    %c0_i32_1 = arith.constant 0 : i32
    return %c0_i32, %c0_i32_0 : i32, i32
  }
  func.func @transform_11(%arg0: i32, %arg1: i32) -> (i32, i32) {
    %c0_i32 = arith.constant 0 : i32
    %c0_i32_0 = arith.constant 0 : i32
    return %arg0, %c0_i32 : i32, i32
  }
}

</mosaic_0001>

<llo_original>
// kernel: tpu_custom_call.1
$region0: #{tpu_custom_call.1}
  #allocation0 [shape = 'u32[]', space=smem, size = 0x4, offset = 0x4, fixed_abs, tag = 'smem constant byte address 0x4 - core index']
  #allocation1 [shape = 'u32[144,128]{1,0:T(1,128)}', space=vmem, size = 0x12000, scoped, tag = 'internal scratch']
  #allocation2 [shape = 'f32[8,32]{1,0:T(8,128)}', space=vmem, size = 0x1000, scoped, tag = 'scratch operand']
  %s0 = inlined_call_operand.hbm [shape: bf16[8,64], index: 0, kind: input, shape index: {}]
  %s1 = inlined_call_operand.vmem [shape: bf16[64,32], index: 1, kind: input, shape index: {}]
  %s2 = inlined_call_operand.hbm [shape: f32[1,32], index: 2, kind: input, shape index: {}]
  %s3 = inlined_call_operand.hbm [shape: bf16[32,32], index: 3, kind: input, shape index: {}]
  %s4 = inlined_call_operand.hbm [shape: f32[1,32], index: 4, kind: input, shape index: {}]
  %s5 = inlined_call_operand.vmem [shape: bf16[3,32,32], index: 5, kind: input, shape index: {}]
  %s6 = inlined_call_operand.hbm [shape: f32[3,1,32], index: 6, kind: input, shape index: {}]
  %s7 = inlined_call_operand.hbm [shape: bf16[3,32,32], index: 7, kind: input, shape index: {}]
  %s8 = inlined_call_operand.hbm [shape: f32[3,1,32], index: 8, kind: input, shape index: {}]
  %s9 = inlined_call_operand.vmem [shape: bf16[32,128], index: 9, kind: input, shape index: {}]
  %s10 = inlined_call_operand.vmem [shape: f32[1,128], index: 10, kind: input, shape index: {}]
  %s11 = inlined_call_operand.hbm [shape: f32[8,128], index: 11, kind: output, shape index: {}]
  %s12 = sld [smem:[#allocation0]]
  $region117: #{tpu_custom_call.1} parent=0
    _
  %s14 = ssub.s32 1, %s12
  %s15 = scalar_select 0, %s14, %s12
  $region1: #{tpu_custom_call.1} parent=0
    #allocation3 [shape = 'u8[2048]{0}', space=vmem, size = 0x800, scoped, tag = 'input window, operand 0, single buffered']
    #allocation4 [shape = 's32[2]{0}', space=sflag, size = 0x8, scoped, tag = 'scoped memory for tpu_custom_call.1']
    #allocation5 [shape = 's32[2]{0}', space=sflag, size = 0x8, scoped, tag = 'scoped memory for tpu_custom_call.1']
    #allocation6 [shape = 'u8[512]{0}', space=vmem, size = 0x400, scoped, tag = 'input window, operand 2, single buffered']
    #allocation7 [shape = 's32[1]{0}', space=sflag, size = 0x4, scoped, tag = 'scoped memory for tpu_custom_call.1']
    #allocation8 [shape = 'u8[8192]{0}', space=vmem, size = 0x2000, scoped, tag = 'input window, operand 3, single buffered']
    #allocation9 [shape = 'u8[512]{0}', space=vmem, size = 0x400, scoped, tag = 'input window, operand 4, single buffered']
    #allocation10 [shape = 's32[1]{0}', space=sflag, size = 0x4, scoped, tag = 'scoped memory for tpu_custom_call.1']
    #allocation11 [shape = 'u8[1024]{0}', space=vmem, size = 0x400, scoped, tag = 'input window, operand 6']
    #allocation12 [shape = 'u8[16384]{0}', space=vmem, size = 0x4000, scoped, tag = 'input window, operand 7']
    #allocation13 [shape = 'u8[1024]{0}', space=vmem, size = 0x400, scoped, tag = 'input window, operand 8']
    #allocation14 [shape = 'u8[4096]{0}', space=vmem, size = 0x1000, scoped, tag = 'output window, operand 0, single buffered']
    %16 = vsyncpa [#allocation4], 0
    %17 = vsyncpa [#allocation7], 0
    %18 = vsyncpa [#allocation10], 0
    %19 = vsyncpa [#allocation5], 0
    loop: start=0, step=1, limit=6
    $region2: #{tpu_custom_call.1} parent=1 // loop_pre_header
      _
    $region3: #{tpu_custom_call.1} parent=1 // loop_header
      %s21 = sphi 0, %s25
      %p22 = scmp.ge.s32.totalorder %s21, 6
      %s28 = sphi 0, %s40
      %s29 = sphi 0, %s36
      %s30 = sphi 0, %s28
      %s31 = sphi 0, %s29
      %s32 = sphi 0, %s30
      %s33 = sphi 0, %s31
      %s43 = sphi 0, %s45
      %s46 = sphi 0, %s43
      %s47 = sphi 0, %s46
      %s63 = sphi 0, %s47
      %s67 = sphi 0, %s67
      %s69 = sphi 0, %s67
      %s70 = sphi 0, %s69
      %s84 = sphi 0, %s70
      %s88 = sphi 0, %s88
      %s90 = sphi 0, %s88
      %s91 = sphi 0, %s90
      %s105 = sphi 0, %s91
      %s109 = sphi 0, %s109
      %s111 = sphi 0, %s109
      %s112 = sphi 0, %s111
      %s126 = sphi 0, %s112
      %s130 = sphi 0, %s130
      %s132 = sphi 0, %s130
      %s133 = sphi 0, %s132
      %s147 = sphi 0, %s133
      %s159 = sphi 0, %s161
      %s162 = sphi 0, %s159
      %s163 = sphi 0, %s162
      %s179 = sphi 0, %s163
      %s191 = sphi 0, %s193
      %s194 = sphi 0, %s191
      %s195 = sphi 0, %s194
      %s211 = sphi 0, %s195
      %s223 = sphi 0, %s225
      %s226 = sphi 0, %s223
      %s227 = sphi 0, %s226
      %s243 = sphi 0, %s227
      %s255 = sphi 0, %s257
      %s258 = sphi 0, %s255
      %s259 = sphi 0, %s258
      %s275 = sphi 0, %s259
      %s279 = sphi 0, %s279
      %s281 = sphi 0, %s279
      %s282 = sphi 0, %s281
      %s296 = sphi 0, %s282
      %s300 = sphi 0, %s300
      %s302 = sphi 0, %s300
      %s303 = sphi 0, %s302
      %s317 = sphi 0, %s303
      %s323 = sphi 0, %s325
      %s326 = sphi 0, %s323
      %s327 = sphi 0, %s326
      %s343 = sphi 0, %s327
    $region4: #{tpu_custom_call.1} parent=1 // loop_header_branch
      %24 = sbr.rel (%p22) target = $region8
    $region5: #{tpu_custom_call.1} parent=1 // loop_body
      %s26 = ssub.s32 %s21, 1
      %s27 = ssub.s32 %s21, 2
      %s34 = sadd.s32 1, %s29
      %p35 = scmp.ge.s32.totalorder %s34, 4
      %s36 = scalar_select %p35, 0, %s34
      %s37 = sadd.s32 1, %s28
      %s38 = scalar_select %p35, %s37, %s28
      %p39 = scmp.ge.s32.totalorder %s38, 1
      %s40 = scalar_select %p39, 0, %s38
      %s41 = ssub.s32 %s28, %s40
      %p42 = scmp.eq.s32.totalorder %s41, 0
      %s44 = sadd.s32 %s43, 1
      %s45 = scalar_select %p42, %s43, %s44
      %p48 = pneg %p42
      %p49 = scmp.eq.s32.totalorder %s21, 3
      %p50 = por %p48, %p49
      %p51 = scmp.ne.s32.totalorder %s43, %s46
      %p52 = scmp.eq.s32.totalorder %s21, 0
      %p53 = por %p51, %p52
      %p54 = scmp.ne.s32.totalorder %s43, %s46
      %p55 = scmp.eq.s32.totalorder %s26, 3
      %p56 = por %p54, %p55
      %p57 = scmp.ne.s32.totalorder %s46, %s47
      %p58 = scmp.eq.s32.totalorder %s26, 0
      %p59 = por %p57, %p58
      %p60 = scmp.ne.s32.totalorder %s46, %s47
      %p61 = scmp.eq.s32.totalorder %s27, 3
      %p62 = por %p60, %p61
      %p64 = scmp.ne.s32.totalorder %s47, %s63
      %p65 = scmp.eq.s32.totalorder %s27, 0
      %p66 = por %p64, %p65
      %s68 = sadd.s32 %s67, 1
      %p71 = scmp.eq.s32.totalorder %s21, 3
      %p72 = scmp.ne.s32.totalorder %s67, %s69
      %p73 = scmp.eq.s32.totalorder %s21, 0
      %p74 = por %p72, %p73
      %p75 = scmp.ne.s32.totalorder %s67, %s69
      %p76 = scmp.eq.s32.totalorder %s26, 3
      %p77 = por %p75, %p76
      %p78 = scmp.ne.s32.totalorder %s69, %s70
      %p79 = scmp.eq.s32.totalorder %s26, 0
      %p80 = por %p78, %p79
      %p81 = scmp.ne.s32.totalorder %s69, %s70
      %p82 = scmp.eq.s32.totalorder %s27, 3
      %p83 = por %p81, %p82
      %p85 = scmp.ne.s32.totalorder %s70, %s84
      %p86 = scmp.eq.s32.totalorder %s27, 0
      %p87 = por %p85, %p86
      %s89 = sadd.s32 %s88, 1
      %p92 = scmp.eq.s32.totalorder %s21, 3
      %p93 = scmp.ne.s32.totalorder %s88, %s90
      %p94 = scmp.eq.s32.totalorder %s21, 0
      %p95 = por %p93, %p94
      %p96 = scmp.ne.s32.totalorder %s88, %s90
      %p97 = scmp.eq.s32.totalorder %s26, 3
      %p98 = por %p96, %p97
      %p99 = scmp.ne.s32.totalorder %s90, %s91
      %p100 = scmp.eq.s32.totalorder %s26, 0
      %p101 = por %p99, %p100
      %p102 = scmp.ne.s32.totalorder %s90, %s91
      %p103 = scmp.eq.s32.totalorder %s27, 3
      %p104 = por %p102, %p103
      %p106 = scmp.ne.s32.totalorder %s91, %s105
      %p107 = scmp.eq.s32.totalorder %s27, 0
      %p108 = por %p106, %p107
      %s110 = sadd.s32 %s109, 1
      %p113 = scmp.eq.s32.totalorder %s21, 3
      %p114 = scmp.ne.s32.totalorder %s109, %s111
      %p115 = scmp.eq.s32.totalorder %s21, 0
      %p116 = por %p114, %p115
      %p117 = scmp.ne.s32.totalorder %s109, %s111
      %p118 = scmp.eq.s32.totalorder %s26, 3
      %p119 = por %p117, %p118
      %p120 = scmp.ne.s32.totalorder %s111, %s112
      %p121 = scmp.eq.s32.totalorder %s26, 0
      %p122 = por %p120, %p121
      %p123 = scmp.ne.s32.totalorder %s111, %s112
      %p124 = scmp.eq.s32.totalorder %s27, 3
      %p125 = por %p123, %p124
      %p127 = scmp.ne.s32.totalorder %s112, %s126
      %p128 = scmp.eq.s32.totalorder %s27, 0
      %p129 = por %p127, %p128
      %s131 = sadd.s32 %s130, 1
      %p134 = scmp.eq.s32.totalorder %s21, 3
      %p135 = scmp.ne.s32.totalorder %s130, %s132
      %p136 = scmp.eq.s32.totalorder %s21, 0
      %p137 = por %p135, %p136
      %p138 = scmp.ne.s32.totalorder %s130, %s132
      %p139 = scmp.eq.s32.totalorder %s26, 3
      %p140 = por %p138, %p139
      %p141 = scmp.ne.s32.totalorder %s132, %s133
      %p142 = scmp.eq.s32.totalorder %s26, 0
      %p143 = por %p141, %p142
      %p144 = scmp.ne.s32.totalorder %s132, %s133
      %p145 = scmp.eq.s32.totalorder %s27, 3
      %p146 = por %p144, %p145
      %p148 = scmp.ne.s32.totalorder %s133, %s147
      %p149 = scmp.eq.s32.totalorder %s27, 0
      %p150 = por %p148, %p149
      %s151 = ssub.s32 %s29, 1
      %p152 = scmp.gt.s32.totalorder %s151, 0
      %s153 = scalar_select %p152, %s151, 0
      %s154 = ssub.s32 %s36, 1
      %p155 = scmp.gt.s32.totalorder %s154, 0
      %s156 = scalar_select %p155, %s154, 0
      %s157 = ssub.s32 %s153, %s156
      %p158 = scmp.eq.s32.totalorder %s157, 0
      %s160 = sadd.s32 %s159, 1
      %s161 = scalar_select %p158, %s159, %s160
      %p164 = pneg %p158
      %p165 = scmp.eq.s32.totalorder %s21, 3
      %p166 = por %p164, %p165
      %p167 = scmp.ne.s32.totalorder %s159, %s162
      %p168 = scmp.eq.s32.totalorder %s21, 0
      %p169 = por %p167, %p168
      %p170 = scmp.ne.s32.totalorder %s159, %s162
      %p171 = scmp.eq.s32.totalorder %s26, 3
      %p172 = por %p170, %p171
      %p173 = scmp.ne.s32.totalorder %s162, %s163
      %p174 = scmp.eq.s32.totalorder %s26, 0
      %p175 = por %p173, %p174
      %p176 = scmp.ne.s32.totalorder %s162, %s163
      %p177 = scmp.eq.s32.totalorder %s27, 3
      %p178 = por %p176, %p177
      %p180 = scmp.ne.s32.totalorder %s163, %s179
      %p181 = scmp.eq.s32.totalorder %s27, 0
      %p182 = por %p180, %p181
      %s183 = ssub.s32 %s29, 1
      %p184 = scmp.gt.s32.totalorder %s183, 0
      %s185 = scalar_select %p184, %s183, 0
      %s186 = ssub.s32 %s36, 1
      %p187 = scmp.gt.s32.totalorder %s186, 0
      %s188 = scalar_select %p187, %s186, 0
      %s189 = ssub.s32 %s185, %s188
      %p190 = scmp.eq.s32.totalorder %s189, 0
      %s192 = sadd.s32 %s191, 1
      %s193 = scalar_select %p190, %s191, %s192
      %p196 = pneg %p190
      %p197 = scmp.eq.s32.totalorder %s21, 3
      %p198 = por %p196, %p197
      %p199 = scmp.ne.s32.totalorder %s191, %s194
      %p200 = scmp.eq.s32.totalorder %s21, 0
      %p201 = por %p199, %p200
      %p202 = scmp.ne.s32.totalorder %s191, %s194
      %p203 = scmp.eq.s32.totalorder %s26, 3
      %p204 = por %p202, %p203
      %p205 = scmp.ne.s32.totalorder %s194, %s195
      %p206 = scmp.eq.s32.totalorder %s26, 0
      %p207 = por %p205, %p206
      %p208 = scmp.ne.s32.totalorder %s194, %s195
      %p209 = scmp.eq.s32.totalorder %s27, 3
      %p210 = por %p208, %p209
      %p212 = scmp.ne.s32.totalorder %s195, %s211
      %p213 = scmp.eq.s32.totalorder %s27, 0
      %p214 = por %p212, %p213
      %s215 = ssub.s32 %s29, 1
      %p216 = scmp.gt.s32.totalorder %s215, 0
      %s217 = scalar_select %p216, %s215, 0
      %s218 = ssub.s32 %s36, 1
      %p219 = scmp.gt.s32.totalorder %s218, 0
      %s220 = scalar_select %p219, %s218, 0
      %s221 = ssub.s32 %s217, %s220
      %p222 = scmp.eq.s32.totalorder %s221, 0
      %s224 = sadd.s32 %s223, 1
      %s225 = scalar_select %p222, %s223, %s224
      %p228 = pneg %p222
      %p229 = scmp.eq.s32.totalorder %s21, 3
      %p230 = por %p228, %p229
      %p231 = scmp.ne.s32.totalorder %s223, %s226
      %p232 = scmp.eq.s32.totalorder %s21, 0
      %p233 = por %p231, %p232
      %p234 = scmp.ne.s32.totalorder %s223, %s226
      %p235 = scmp.eq.s32.totalorder %s26, 3
      %p236 = por %p234, %p235
      %p237 = scmp.ne.s32.totalorder %s226, %s227
      %p238 = scmp.eq.s32.totalorder %s26, 0
      %p239 = por %p237, %p238
      %p240 = scmp.ne.s32.totalorder %s226, %s227
      %p241 = scmp.eq.s32.totalorder %s27, 3
      %p242 = por %p240, %p241
      %p244 = scmp.ne.s32.totalorder %s227, %s243
      %p245 = scmp.eq.s32.totalorder %s27, 0
      %p246 = por %p244, %p245
      %s247 = ssub.s32 %s29, 1
      %p248 = scmp.gt.s32.totalorder %s247, 0
      %s249 = scalar_select %p248, %s247, 0
      %s250 = ssub.s32 %s36, 1
      %p251 = scmp.gt.s32.totalorder %s250, 0
      %s252 = scalar_select %p251, %s250, 0
      %s253 = ssub.s32 %s249, %s252
      %p254 = scmp.eq.s32.totalorder %s253, 0
      %s256 = sadd.s32 %s255, 1
      %s257 = scalar_select %p254, %s255, %s256
      %p260 = pneg %p254
      %p261 = scmp.eq.s32.totalorder %s21, 3
      %p262 = por %p260, %p261
      %p263 = scmp.ne.s32.totalorder %s255, %s258
      %p264 = scmp.eq.s32.totalorder %s21, 0
      %p265 = por %p263, %p264
      %p266 = scmp.ne.s32.totalorder %s255, %s258
      %p267 = scmp.eq.s32.totalorder %s26, 3
      %p268 = por %p266, %p267
      %p269 = scmp.ne.s32.totalorder %s258, %s259
      %p270 = scmp.eq.s32.totalorder %s26, 0
      %p271 = por %p269, %p270
      %p272 = scmp.ne.s32.totalorder %s258, %s259
      %p273 = scmp.eq.s32.totalorder %s27, 3
      %p274 = por %p272, %p273
      %p276 = scmp.ne.s32.totalorder %s259, %s275
      %p277 = scmp.eq.s32.totalorder %s27, 0
      %p278 = por %p276, %p277
      %s280 = sadd.s32 %s279, 1
      %p283 = scmp.eq.s32.totalorder %s21, 3
      %p284 = scmp.ne.s32.totalorder %s279, %s281
      %p285 = scmp.eq.s32.totalorder %s21, 0
      %p286 = por %p284, %p285
      %p287 = scmp.ne.s32.totalorder %s279, %s281
      %p288 = scmp.eq.s32.totalorder %s26, 3
      %p289 = por %p287, %p288
      %p290 = scmp.ne.s32.totalorder %s281, %s282
      %p291 = scmp.eq.s32.totalorder %s26, 0
      %p292 = por %p290, %p291
      %p293 = scmp.ne.s32.totalorder %s281, %s282
      %p294 = scmp.eq.s32.totalorder %s27, 3
      %p295 = por %p293, %p294
      %p297 = scmp.ne.s32.totalorder %s282, %s296
      %p298 = scmp.eq.s32.totalorder %s27, 0
      %p299 = por %p297, %p298
      %s301 = sadd.s32 %s300, 1
      %p304 = scmp.eq.s32.totalorder %s21, 3
      %p305 = scmp.ne.s32.totalorder %s300, %s302
      %p306 = scmp.eq.s32.totalorder %s21, 0
      %p307 = por %p305, %p306
      %p308 = scmp.ne.s32.totalorder %s300, %s302
      %p309 = scmp.eq.s32.totalorder %s26, 3
      %p310 = por %p308, %p309
      %p311 = scmp.ne.s32.totalorder %s302, %s303
      %p312 = scmp.eq.s32.totalorder %s26, 0
      %p313 = por %p311, %p312
      %p314 = scmp.ne.s32.totalorder %s302, %s303
      %p315 = scmp.eq.s32.totalorder %s27, 3
      %p316 = por %p314, %p315
      %p318 = scmp.ne.s32.totalorder %s303, %s317
      %p319 = scmp.eq.s32.totalorder %s27, 0
      %p320 = por %p318, %p319
      %s321 = ssub.s32 %s28, %s40
      %p322 = scmp.eq.s32.totalorder %s321, 0
      %s324 = sadd.s32 %s323, 1
      %s325 = scalar_select %p322, %s323, %s324
      %p328 = pneg %p322
      %p329 = scmp.eq.s32.totalorder %s21, 3
      %p330 = por %p328, %p329
      %p331 = scmp.ne.s32.totalorder %s323, %s326
      %p332 = scmp.eq.s32.totalorder %s21, 0
      %p333 = por %p331, %p332
      %p334 = scmp.ne.s32.totalorder %s323, %s326
      %p335 = scmp.eq.s32.totalorder %s26, 3
      %p336 = por %p334, %p335
      %p337 = scmp.ne.s32.totalorder %s326, %s327
      %p338 = scmp.eq.s32.totalorder %s26, 0
      %p339 = por %p337, %p338
      %p340 = scmp.ne.s32.totalorder %s326, %s327
      %p341 = scmp.eq.s32.totalorder %s27, 3
      %p342 = por %p340, %p341
      %p344 = scmp.ne.s32.totalorder %s327, %s343
      %p345 = scmp.eq.s32.totalorder %s27, 0
      %p346 = por %p344, %p345
      %p347 = scmp.le.s32.totalorder 1, %s21
      %p348 = scmp.lt.s32.totalorder %s21, 5
      %p349 = pnand %p347, %p348
      %p350 = pneg %p349
      // Predicated region
      $region9: #{tpu_custom_call.1} parent=5 // pred_check
        _
      $region10: #{tpu_custom_call.1} parent=5 // pred_check_branch
        %352 = sbr.rel (%p349) target = $region12
      $region11: #{tpu_custom_call.1} parent=5 // pred_region
        %s353 = ssub.s32 %s21, 1
        // Predicated region
        $region13: #{tpu_custom_call.1} parent=11 // pred_check
          %p354 = pneg %p59
        $region14: #{tpu_custom_call.1} parent=11 // pred_check_branch
          %356 = sbr.rel (%p354) target = $region16
        $region15: #{tpu_custom_call.1} parent=11 // pred_region
          %s358 = ssub.s32 64, 64
          %359 = vsyncadd [#allocation4], %s358
          %s360 = smul.addr %s30, 64
          %s361 = scalar_lea.hbm %s0, %s360
          %s363 = sshll.u32 [#allocation3], 4
          %s364 = int_to_ptr.vmem [resolvable:$true] %s363
          %366 = dma.hbm_to_vmem [thread:$0]  %s361, 64, %s364, [#allocation4]
        $region16: #{tpu_custom_call.1} parent=11 // pred_fallthru
          _
        // Predicated region
        $region17: #{tpu_custom_call.1} parent=11 // pred_check
          %p367 = pneg %p80
        $region18: #{tpu_custom_call.1} parent=11 // pred_check_branch
          %369 = sbr.rel (%p367) target = $region20
        $region19: #{tpu_custom_call.1} parent=11 // pred_region
          _
        $region20: #{tpu_custom_call.1} parent=11 // pred_fallthru
          _
        // Predicated region
        $region21: #{tpu_custom_call.1} parent=11 // pred_check
          %p370 = pneg %p101
        $region22: #{tpu_custom_call.1} parent=11 // pred_check_branch
          %372 = sbr.rel (%p370) target = $region24
        $region23: #{tpu_custom_call.1} parent=11 // pred_region
          %s374 = ssub.s32 16, 16
          %375 = vsyncadd [#allocation7], %s374
          %s377 = sshll.u32 [#allocation6], 4
          %s378 = int_to_ptr.vmem [resolvable:$true] %s377
          %380 = dma.hbm_to_vmem [thread:$0]  %s2, 16, %s378, [#allocation7]
        $region24: #{tpu_custom_call.1} parent=11 // pred_fallthru
          _
        // Predicated region
        $region25: #{tpu_custom_call.1} parent=11 // pred_check
          %p381 = pneg %p122
        $region26: #{tpu_custom_call.1} parent=11 // pred_check_branch
          %383 = sbr.rel (%p381) target = $region28
        $region27: #{tpu_custom_call.1} parent=11 // pred_region
          %s385 = ssub.s32 256, 256
          %386 = vsyncadd [#allocation7], %s385
          %s387 = sshll.u32 [#allocation8], 4
          %s388 = int_to_ptr.vmem [resolvable:$true] %s387
          %393 = dma.hbm_to_vmem [thread:$0]  %s3, 256, %s388, [#allocation7], 64, 64, 4
        $region28: #{tpu_custom_call.1} parent=11 // pred_fallthru
          _
        // Predicated region
        $region29: #{tpu_custom_call.1} parent=11 // pred_check
          %p394 = pneg %p143
        $region30: #{tpu_custom_call.1} parent=11 // pred_check_branch
          %396 = sbr.rel (%p394) target = $region32
        $region31: #{tpu_custom_call.1} parent=11 // pred_region
          %s398 = ssub.s32 16, 16
          %399 = vsyncadd [#allocation10], %s398
          %s401 = sshll.u32 [#allocation9], 4
          %s402 = int_to_ptr.vmem [resolvable:$true] %s401
          %404 = dma.hbm_to_vmem [thread:$0]  %s4, 16, %s402, [#allocation10]
        $region32: #{tpu_custom_call.1} parent=11 // pred_fallthru
          _
        // Predicated region
        $region33: #{tpu_custom_call.1} parent=11 // pred_check
          %p405 = pneg %p292
        $region34: #{tpu_custom_call.1} parent=11 // pred_check_branch
          %407 = sbr.rel (%p405) target = $region36
        $region35: #{tpu_custom_call.1} parent=11 // pred_region
          _
        $region36: #{tpu_custom_call.1} parent=11 // pred_fallthru
          _
        // Predicated region
        $region37: #{tpu_custom_call.1} parent=11 // pred_check
          %p408 = pneg %p313
        $region38: #{tpu_custom_call.1} parent=11 // pred_check_branch
          %410 = sbr.rel (%p408) target = $region40
        $region39: #{tpu_custom_call.1} parent=11 // pred_region
          _
        $region40: #{tpu_custom_call.1} parent=11 // pred_fallthru
          _
      $region12: #{tpu_custom_call.1} parent=5 // pred_fallthru
        _
      %p411 = scmp.lt.s32.totalorder %s21, 4
      // Predicated region
      $region41: #{tpu_custom_call.1} parent=5 // pred_check
        %p412 = pneg %p411
      $region42: #{tpu_custom_call.1} parent=5 // pred_check_branch
        %414 = sbr.rel (%p412) target = $region44
      $region43: #{tpu_custom_call.1} parent=5 // pred_region
        // Predicated region
        $region45: #{tpu_custom_call.1} parent=43 // pred_check
          %p415 = pneg %p169
        $region46: #{tpu_custom_call.1} parent=43 // pred_check_branch
          %417 = sbr.rel (%p415) target = $region48
        $region47: #{tpu_custom_call.1} parent=43 // pred_region
          %s418 = ssub.s32 %s29, 1
          %p419 = scmp.gt.s32.totalorder %s418, 0
          %s420 = scalar_select %p419, %s418, 0
          %p421 = scmp.lt.s32.totalorder %s420, 2
          %s422 = scalar_select %p421, %s420, 2
          %s423 = smul.addr %s422, 4
          %s424 = smul.addr %s423, 4
          %s425 = scalar_lea.vmem %s5, %s424
          %s426 = ssub.s32 %s29, 1
          %p427 = scmp.gt.s32.totalorder %s426, 0
          %s428 = scalar_select %p427, %s426, 0
        $region48: #{tpu_custom_call.1} parent=43 // pred_fallthru
          _
        // Predicated region
        $region49: #{tpu_custom_call.1} parent=43 // pred_check
          %p429 = pneg %p201
        $region50: #{tpu_custom_call.1} parent=43 // pred_check_branch
          %431 = sbr.rel (%p429) target = $region52
        $region51: #{tpu_custom_call.1} parent=43 // pred_region
          %s432 = sand.u32 %s21, 1
          %s433 = scalar_lea.sflag [#allocation4], %s432
          %s434 = sand.u32 %s191, 1
          %s435 = scalar_lea.vmem [#allocation11], %s434
          %s436 = ssub.s32 %s29, 1
          %p437 = scmp.gt.s32.totalorder %s436, 0
          %s438 = scalar_select %p437, %s436, 0
          %s440 = ssub.s32 16, 16
          %441 = vsyncadd %s433, %s440
          %s442 = smul.addr %s438, 16
          %s443 = scalar_lea.hbm %s6, %s442
          %s445 = sshll.u32 %s435, 4
          %s446 = int_to_ptr.vmem [resolvable:$true] %s445
          %448 = dma.hbm_to_vmem [thread:$0]  %s443, 16, %s446, %s433
        $region52: #{tpu_custom_call.1} parent=43 // pred_fallthru
          _
        // Predicated region
        $region53: #{tpu_custom_call.1} parent=43 // pred_check
          %p449 = pneg %p233
        $region54: #{tpu_custom_call.1} parent=43 // pred_check_branch
          %451 = sbr.rel (%p449) target = $region56
        $region55: #{tpu_custom_call.1} parent=43 // pred_region
          %s452 = sand.u32 %s21, 1
          %s453 = scalar_lea.sflag [#allocation4], %s452
          %s454 = sand.u32 %s223, 1
          %s455 = smul.addr %s454, 16
          %s456 = scalar_lea.vmem [#allocation12], %s455
          %s457 = ssub.s32 %s29, 1
          %p458 = scmp.gt.s32.totalorder %s457, 0
          %s459 = scalar_select %p458, %s457, 0
          %s461 = ssub.s32 256, 256
          %462 = vsyncadd %s453, %s461
          %s463 = smul.addr %s459, 4
          %s464 = smul.addr %s463, 64
          %s465 = scalar_lea.hbm %s7, %s464
          %s466 = sshll.u32 %s456, 4
          %s467 = int_to_ptr.vmem [resolvable:$true] %s466
          %472 = dma.hbm_to_vmem [thread:$0]  %s465, 256, %s467, %s453, 64, 64, 4
        $region56: #{tpu_custom_call.1} parent=43 // pred_fallthru
          _
        // Predicated region
        $region57: #{tpu_custom_call.1} parent=43 // pred_check
          %p473 = pneg %p265
        $region58: #{tpu_custom_call.1} parent=43 // pred_check_branch
          %475 = sbr.rel (%p473) target = $region60
        $region59: #{tpu_custom_call.1} parent=43 // pred_region
          %s476 = sand.u32 %s21, 1
          %s477 = scalar_lea.sflag [#allocation4], %s476
          %s478 = sand.u32 %s255, 1
          %s479 = scalar_lea.vmem [#allocation13], %s478
          %s480 = ssub.s32 %s29, 1
          %p481 = scmp.gt.s32.totalorder %s480, 0
          %s482 = scalar_select %p481, %s480, 0
          %s484 = ssub.s32 16, 16
          %485 = vsyncadd %s477, %s484
          %s486 = smul.addr %s482, 16
          %s487 = scalar_lea.hbm %s8, %s486
          %s489 = sshll.u32 %s479, 4
          %s490 = int_to_ptr.vmem [resolvable:$true] %s489
          %492 = dma.hbm_to_vmem [thread:$0]  %s487, 16, %s490, %s477
        $region60: #{tpu_custom_call.1} parent=43 // pred_fallthru
          _
      $region44: #{tpu_custom_call.1} parent=5 // pred_fallthru
        _
      %p493 = scmp.le.s32.totalorder 1, %s21
      %p494 = scmp.lt.s32.totalorder %s21, 5
      %p495 = pnand %p493, %p494
      %p496 = pneg %p495
      // Predicated region
      $region61: #{tpu_custom_call.1} parent=5 // pred_check
        _
      $region62: #{tpu_custom_call.1} parent=5 // pred_check_branch
        %498 = sbr.rel (%p495) target = $region64
      $region63: #{tpu_custom_call.1} parent=5 // pred_region
        %s499 = ssub.s32 %s21, 1
        // Predicated region
        $region65: #{tpu_custom_call.1} parent=63 // pred_check
          %p500 = pneg %p59
        $region66: #{tpu_custom_call.1} parent=63 // pred_check_branch
          %502 = sbr.rel (%p500) target = $region68
        $region67: #{tpu_custom_call.1} parent=63 // pred_region
          %503 = dma.done [#allocation4], 64
        $region68: #{tpu_custom_call.1} parent=63 // pred_fallthru
          _
        // Predicated region
        $region69: #{tpu_custom_call.1} parent=63 // pred_check
          %p504 = pneg %p101
        $region70: #{tpu_custom_call.1} parent=63 // pred_check_branch
          %506 = sbr.rel (%p504) target = $region72
        $region71: #{tpu_custom_call.1} parent=63 // pred_region
          %507 = dma.done [#allocation7], 16
        $region72: #{tpu_custom_call.1} parent=63 // pred_fallthru
          _
        // Predicated region
        $region73: #{tpu_custom_call.1} parent=63 // pred_check
          %p508 = pneg %p122
        $region74: #{tpu_custom_call.1} parent=63 // pred_check_branch
          %510 = sbr.rel (%p508) target = $region76
        $region75: #{tpu_custom_call.1} parent=63 // pred_region
          %511 = dma.done [#allocation7], 256
        $region76: #{tpu_custom_call.1} parent=63 // pred_fallthru
          _
        // Predicated region
        $region77: #{tpu_custom_call.1} parent=63 // pred_check
          %p512 = pneg %p143
        $region78: #{tpu_custom_call.1} parent=63 // pred_check_branch
          %514 = sbr.rel (%p512) target = $region80
        $region79: #{tpu_custom_call.1} parent=63 // pred_region
          %515 = dma.done [#allocation10], 16
        $region80: #{tpu_custom_call.1} parent=63 // pred_fallthru
          _
        %s516 = sand.u32 %s26, 1
        %s517 = scalar_lea.sflag [#allocation4], %s516
        %s518 = sand.u32 %s194, 1
        %s519 = scalar_lea.vmem [#allocation11], %s518
        // Predicated region
        $region81: #{tpu_custom_call.1} parent=63 // pred_check
          %p520 = pneg %p207
        $region82: #{tpu_custom_call.1} parent=63 // pred_check_branch
          %522 = sbr.rel (%p520) target = $region84
        $region83: #{tpu_custom_call.1} parent=63 // pred_region
          %523 = dma.done %s517, 16
        $region84: #{tpu_custom_call.1} parent=63 // pred_fallthru
          _
        %s524 = sand.u32 %s26, 1
        %s525 = scalar_lea.sflag [#allocation4], %s524
        %s526 = sand.u32 %s226, 1
        %s527 = smul.addr %s526, 16
        %s528 = scalar_lea.vmem [#allocation12], %s527
        // Predicated region
        $region85: #{tpu_custom_call.1} parent=63 // pred_check
          %p529 = pneg %p239
        $region86: #{tpu_custom_call.1} parent=63 // pred_check_branch
          %531 = sbr.rel (%p529) target = $region88
        $region87: #{tpu_custom_call.1} parent=63 // pred_region
          %532 = dma.done %s525, 256
        $region88: #{tpu_custom_call.1} parent=63 // pred_fallthru
          _
        %s533 = sand.u32 %s26, 1
        %s534 = scalar_lea.sflag [#allocation4], %s533
        %s535 = sand.u32 %s258, 1
        %s536 = scalar_lea.vmem [#allocation13], %s535
        // Predicated region
        $region89: #{tpu_custom_call.1} parent=63 // pred_check
          %p537 = pneg %p271
        $region90: #{tpu_custom_call.1} parent=63 // pred_check_branch
          %539 = sbr.rel (%p537) target = $region92
        $region91: #{tpu_custom_call.1} parent=63 // pred_region
          %540 = dma.done %s534, 16
        $region92: #{tpu_custom_call.1} parent=63 // pred_fallthru
          _
        %p541 = pneg %p59
        %p542 = pneg %p56
        %p543 = pneg %p80
        %p544 = pneg %p77
        %p545 = pneg %p101
        %p546 = pneg %p98
        %p547 = pneg %p122
        %p548 = pneg %p119
        %p549 = pneg %p143
        %p550 = pneg %p140
        %s551 = ssub.s32 %s31, 1
        %p552 = scmp.gt.s32.totalorder %s551, 0
        %s553 = scalar_select %p552, %s551, 0
        %p554 = scmp.lt.s32.totalorder %s553, 2
        %s555 = scalar_select %p554, %s553, 2
        %s556 = smul.addr %s555, 4
        %s557 = smul.addr %s556, 4
        %s558 = scalar_lea.vmem %s5, %s557
        %p559 = pneg %p175
        %p560 = pneg %p172
        %s561 = sand.u32 %s26, 1
        %s562 = scalar_lea.sflag [#allocation4], %s561
        %s563 = sand.u32 %s194, 1
        %s564 = scalar_lea.vmem [#allocation11], %s563
        %p565 = pneg %p207
        %p566 = pneg %p204
        %s567 = sand.u32 %s26, 1
        %s568 = scalar_lea.sflag [#allocation4], %s567
        %s569 = sand.u32 %s226, 1
        %s570 = smul.addr %s569, 16
        %s571 = scalar_lea.vmem [#allocation12], %s570
        %p572 = pneg %p239
        %p573 = pneg %p236
        %s574 = sand.u32 %s26, 1
        %s575 = scalar_lea.sflag [#allocation4], %s574
        %s576 = sand.u32 %s258, 1
        %s577 = scalar_lea.vmem [#allocation13], %s576
        %p578 = pneg %p271
        %p579 = pneg %p268
        %p580 = pneg %p292
        %p581 = pneg %p289
        %p582 = pneg %p313
        %p583 = pneg %p310
        %p584 = pneg %p339
        %p585 = pneg %p336
        %s586 = ssub.s32 %s31, 1
        %p587 = scmp.gt.s32.totalorder %s586, 0
        %s588 = scalar_select %p587, %s586, 0
        %p589 = scmp.lt.s32.totalorder %s588, 2
        %s590 = scalar_select %p589, %s588, 2
        %s591 = smul.addr %s590, 4
        %s592 = smul.addr %s591, 4
        %s593 = scalar_lea.vmem %s5, %s592
        %s594 = ssub.s32 %s31, 1
        %p595 = scmp.gt.s32.totalorder %s594, 0
        %s596 = scalar_select %p595, %s594, 0
        %s597 = ssub.s32 %s31, 1
        %p598 = scmp.gt.s32.totalorder %s597, 0
        %s599 = scalar_select %p598, %s597, 0
        %s600 = ssub.s32 %s31, 1
        %p601 = scmp.gt.s32.totalorder %s600, 0
        %s602 = scalar_select %p601, %s600, 0
        %s603 = ssub.s32 %s31, 1
        %p604 = scmp.gt.s32.totalorder %s603, 0
        %s605 = scalar_select %p604, %s603, 0
        %p607 = scmp.eq.s32.totalorder %s31, 0
        // Predicated region
        $region93: #{tpu_custom_call.1} parent=63 // pred_check
          %p608 = pneg %p607
        $region94: #{tpu_custom_call.1} parent=63 // pred_check_branch
          %610 = sbr.rel (%p608) target = $region96
        $region95: #{tpu_custom_call.1} parent=63 // pred_region
          %v611 = vld [vmem:[#allocation3] sm:$0xf]
          %v612 = vunpack.c.l.bf16 %v611
          %vm613 = vcmask 523264
          %v614 = vsel %vm613, %v612, 0.0
          %615 = vadd.xlane.f32.xlu0 %v614
          %v616 = vpop.xlane.xlu0 %615
          %v617 = vmul.f32 %v612, %v612
          %v618 = vsel %vm613, %v617, 0.0
          %619 = vadd.xlane.f32.xlu0 %v618
          %v620 = vpop.xlane.xlu0 %619
          %v621 = vmul.f32 %v616, 0.015625
          %v622 = vmul.f32 %v620, 0.015625
          %v623 = vmul.f32 %v621, %v621
          %v624 = vsub.f32 %v622, %v623
          %v625 = vmax.f32 %v624, 0.0
          %v626 = vsub.f32 %v612, %v621
          %v627 = vadd.f32 %v625, 1e-06
          %v628 = vrsqrt.pop %v627
          %v629 = vmul.f32 %v626, %v628
          %v630 = vmul.f32 %v629, 0.5
          %v631 = vtanh.pop %v630
          %v632 = vmul.f32 %v631, 0.5
          %v633 = vadd.f32 %v632, 0.5
          %v634 = vmul.f32 %v629, %v633
          %v635 = vpack.c.bf16 %v634, %v634
          %v636 = vld [vmem:[%s1] sm:$0xf]
          %v637 = vld [vmem:[%s1 + $0x4] sm:$0xf]
          %v638 = vld [vmem:[%s1 + $0x8] sm:$0xf]
          %v639 = vld [vmem:[%s1 + $0xc] sm:$0xf]
          %v640 = vld [vmem:[%s1 + $0x10] sm:$0xf]
          %v641 = vld [vmem:[%s1 + $0x14] sm:$0xf]
          %v642 = vld [vmem:[%s1 + $0x18] sm:$0xf]
          %v643 = vld [vmem:[%s1 + $0x1c] sm:$0xf]
          %v644 = vld [vmem:[#allocation6] sm:$0x1]
          %v646 = vlaneseq
          %v647 = vshrl.u32 %v646, 7
          %v648 = vsub.s32 0, %v647
          %v649 = vrot.slane %v644, %v648
          %v659 = vunpack.c.l.b16 %v636
          %v660 = vunpack.c.l.b16 %v637
          %v661 = vunpack.c.l.b16 %v638
          %v662 = vunpack.c.l.b16 %v639
          %v663 = vunpack.c.l.b16 %v640
          %v664 = vunpack.c.l.b16 %v641
          %v665 = vunpack.c.l.b16 %v642
          %v666 = vunpack.c.l.b16 %v643
          %v667 = vpack.c.b16 %v660, %v659
          %v668 = vpack.c.b16 %v662, %v661
          %v669 = vpack.c.b16 %v664, %v663
          %v670 = vpack.c.b16 %v666, %v665
          %v676 = vsel %vm613, %v635, 0
          %678 = vmatprep.subr.bf16.mxu0 0
          %679 = vmatpush1.bf16.msra.mxu0 0
          %680 = vmatprep.subr.bf16.mxu0 0
          %681 = vmatpush1.bf16.msra.mxu0 0
          %682 = vmatprep.subr.bf16.mxu0 0
          %683 = vmatpush1.bf16.msra.mxu0 0
          %684 = vmatprep.subr.bf16.mxu0 0
          %685 = vmatpush1.bf16.msra.mxu0 0
          %686 = vmatprep.subr.bf16.mxu0 0
          %687 = vmatpush1.bf16.msra.mxu0 %v670
          %688 = vmatprep.subr.bf16.mxu0 0
          %689 = vmatpush1.bf16.msra.mxu0 %v669
          %690 = vmatprep.subr.bf16.mxu0 0
          %691 = vmatpush1.bf16.msra.mxu0 %v668
          %692 = vmatprep.subr.bf16.mxu0 0
          %693 = vmatpush1.bf16.msra.mxu0 %v667
          %694 = vmatprep.subr.bf16.mxu0 0
          %695 = vmatpush2.bf16.msra.mxu0 0
          %696 = vmatprep.subr.bf16.mxu0 0
          %697 = vmatpush2.bf16.msra.mxu0 0
          %698 = vmatprep.subr.bf16.mxu0 0
          %699 = vmatpush2.bf16.msra.mxu0 0
          %700 = vmatprep.subr.bf16.mxu0 0
          %701 = vmatpush2.bf16.msra.mxu0 0
          %702 = vmatprep.subr.bf16.mxu0 0
          %703 = vmatpush2.bf16.msra.mxu0 0
          %704 = vmatprep.subr.bf16.mxu0 0
          %705 = vmatpush2.bf16.msra.mxu0 0
          %706 = vmatprep.subr.bf16.mxu0 0
          %707 = vmatpush2.bf16.msra.mxu0 0
          %708 = vmatprep.subr.bf16.mxu0 0
          %709 = vmatpush2.bf16.msra.mxu0 0
          %710 = vmatprep.mubr.bf16.mxu0 0
          %711 = vmatmul.mubr.bf16.gmra.mxu0 %v676
          %v712 = vpop.f32.mrf.mxu0
          %v713 = vadd.f32 %v649, %v712
          %v714 = vpop.f32.mrf.mxu0
          %v715 = vpop.f32.mrf.mxu0
          %v716 = vpop.f32.mrf.mxu0
          %717 = vdwg.mxu0
          %vm718 = vcmask 261120
          %v719 = vsel %vm718, %v713, 0.0
          %720 = vadd.xlane.f32.xlu0 %v719
          %v721 = vpop.xlane.xlu0 %720
          %v722 = vmul.f32 %v713, %v713
          %v723 = vsel %vm718, %v722, 0.0
          %724 = vadd.xlane.f32.xlu0 %v723
          %v725 = vpop.xlane.xlu0 %724
          %v726 = vmul.f32 %v721, 0.03125
          %v727 = vmul.f32 %v725, 0.03125
          %v728 = vmul.f32 %v726, %v726
          %v729 = vsub.f32 %v727, %v728
          %v730 = vmax.f32 %v729, 0.0
          %v731 = vsub.f32 %v713, %v726
          %v732 = vadd.f32 %v730, 1e-06
          %v733 = vrsqrt.pop %v732
          %v734 = vmul.f32 %v731, %v733
          %v735 = vmul.f32 %v734, 0.5
          %v736 = vtanh.pop %v735
          %v737 = vmul.f32 %v736, 0.5
          %v738 = vadd.f32 %v737, 0.5
          %v739 = vmul.f32 %v734, %v738
          %v740 = vpack.c.bf16 %v739, %v739
          %v741 = vld [vmem:[#allocation8] sm:$0xf]
          %v742 = vld [vmem:[#allocation8 + $0x4] sm:$0xf]
          %v743 = vld [vmem:[#allocation8 + $0x8] sm:$0xf]
          %v744 = vld [vmem:[#allocation8 + $0xc] sm:$0xf]
          %v745 = vld [vmem:[#allocation9] sm:$0x1]
          %v747 = vlaneseq
          %v748 = vshrl.u32 %v747, 7
          %v749 = vsub.s32 0, %v748
          %v750 = vrot.slane %v745, %v749
          %v756 = vunpack.c.l.b16 %v741
          %v757 = vunpack.c.l.b16 %v742
          %v758 = vunpack.c.l.b16 %v743
          %v759 = vunpack.c.l.b16 %v744
          %v760 = vpack.c.b16 %v757, %v756
          %v761 = vpack.c.b16 %v759, %v758
          %v765 = vsel %vm718, %v740, 0
          %767 = vmatprep.subr.bf16.mxu0 0
          %768 = vmatpush1.bf16.msra.mxu0 0
          %769 = vmatprep.subr.bf16.mxu0 0
          %770 = vmatpush1.bf16.msra.mxu0 0
          %771 = vmatprep.subr.bf16.mxu0 0
          %772 = vmatpush1.bf16.msra.mxu0 0
          %773 = vmatprep.subr.bf16.mxu0 0
          %774 = vmatpush1.bf16.msra.mxu0 0
          %775 = vmatprep.subr.bf16.mxu0 0
          %776 = vmatpush1.bf16.msra.mxu0 0
          %777 = vmatprep.subr.bf16.mxu0 0
          %778 = vmatpush1.bf16.msra.mxu0 0
          %779 = vmatprep.subr.bf16.mxu0 0
          %780 = vmatpush1.bf16.msra.mxu0 %v761
          %781 = vmatprep.subr.bf16.mxu0 0
          %782 = vmatpush1.bf16.msra.mxu0 %v760
          %783 = vmatprep.subr.bf16.mxu0 0
          %784 = vmatpush2.bf16.msra.mxu0 0
          %785 = vmatprep.subr.bf16.mxu0 0
          %786 = vmatpush2.bf16.msra.mxu0 0
          %787 = vmatprep.subr.bf16.mxu0 0
          %788 = vmatpush2.bf16.msra.mxu0 0
          %789 = vmatprep.subr.bf16.mxu0 0
          %790 = vmatpush2.bf16.msra.mxu0 0
          %791 = vmatprep.subr.bf16.mxu0 0
          %792 = vmatpush2.bf16.msra.mxu0 0
          %793 = vmatprep.subr.bf16.mxu0 0
          %794 = vmatpush2.bf16.msra.mxu0 0
          %795 = vmatprep.subr.bf16.mxu0 0
          %796 = vmatpush2.bf16.msra.mxu0 0
          %797 = vmatprep.subr.bf16.mxu0 0
          %798 = vmatpush2.bf16.msra.mxu0 0
          %799 = vmatprep.mubr.bf16.mxu0 0
          %800 = vmatmul.mubr.bf16.gmra.mxu0 %v765
          %v801 = vpop.f32.mrf.mxu0
          %v802 = vadd.f32 %v750, %v801
          %v803 = vpop.f32.mrf.mxu0
          %v804 = vpop.f32.mrf.mxu0
          %v805 = vpop.f32.mrf.mxu0
          %806 = vdwg.mxu0
          %807 = vst.msk [vmem:[#allocation2] sm:$0xff] %vm718, %v802
        $region96: #{tpu_custom_call.1} parent=63 // pred_fallthru
          _
        %p808 = scmp.gt.s32.totalorder %s31, 0
        // Predicated region
        $region97: #{tpu_custom_call.1} parent=63 // pred_check
          %p809 = pneg %p808
        $region98: #{tpu_custom_call.1} parent=63 // pred_check_branch
          %811 = sbr.rel (%p809) target = $region100
        $region99: #{tpu_custom_call.1} parent=63 // pred_region
          %v812 = vld [vmem:[#allocation2] sm:$0xff]
          %vm813 = vcmask 261120
          %v814 = vsel %vm813, %v812, 0.0
          %815 = vadd.xlane.f32.xlu0 %v814
          %v816 = vpop.xlane.xlu0 %815
          %v817 = vmul.f32 %v812, %v812
          %v818 = vsel %vm813, %v817, 0.0
          %819 = vadd.xlane.f32.xlu0 %v818
          %v820 = vpop.xlane.xlu0 %819
          %v821 = vmul.f32 %v816, 0.03125
          %v822 = vmul.f32 %v820, 0.03125
          %v823 = vmul.f32 %v821, %v821
          %v824 = vsub.f32 %v822, %v823
          %v825 = vmax.f32 %v824, 0.0
          %v826 = vsub.f32 %v812, %v821
          %v827 = vadd.f32 %v825, 1e-06
          %v828 = vrsqrt.pop %v827
          %v829 = vmul.f32 %v826, %v828
          %v830 = vmul.f32 %v829, 0.5
          %v831 = vtanh.pop %v830
          %v832 = vmul.f32 %v831, 0.5
          %v833 = vadd.f32 %v832, 0.5
          %v834 = vmul.f32 %v829, %v833
          %v835 = vpack.c.bf16 %v834, %v834
          %v836 = vld [vmem:[%s593] sm:$0xf]
          %v837 = vld [vmem:[%s593 + $0x4] sm:$0xf]
          %v838 = vld [vmem:[%s593 + $0x8] sm:$0xf]
          %v839 = vld [vmem:[%s593 + $0xc] sm:$0xf]
          %v840 = vld [vmem:[%s519] sm:$0x1]
          %v842 = vlaneseq
          %v843 = vshrl.u32 %v842, 7
          %v844 = vsub.s32 0, %v843
          %v845 = vrot.slane %v840, %v844
          %v851 = vunpack.c.l.b16 %v836
          %v852 = vunpack.c.l.b16 %v837
          %v853 = vunpack.c.l.b16 %v838
          %v854 = vunpack.c.l.b16 %v839
          %v855 = vpack.c.b16 %v852, %v851
          %v856 = vpack.c.b16 %v854, %v853
          %v860 = vsel %vm813, %v835, 0
          %862 = vmatprep.subr.bf16.mxu0 0
          %863 = vmatpush1.bf16.msra.mxu0 0
          %864 = vmatprep.subr.bf16.mxu0 0
          %865 = vmatpush1.bf16.msra.mxu0 0
          %866 = vmatprep.subr.bf16.mxu0 0
          %867 = vmatpush1.bf16.msra.mxu0 0
          %868 = vmatprep.subr.bf16.mxu0 0
          %869 = vmatpush1.bf16.msra.mxu0 0
          %870 = vmatprep.subr.bf16.mxu0 0
          %871 = vmatpush1.bf16.msra.mxu0 0
          %872 = vmatprep.subr.bf16.mxu0 0
          %873 = vmatpush1.bf16.msra.mxu0 0
          %874 = vmatprep.subr.bf16.mxu0 0
          %875 = vmatpush1.bf16.msra.mxu0 %v856
          %876 = vmatprep.subr.bf16.mxu0 0
          %877 = vmatpush1.bf16.msra.mxu0 %v855
          %878 = vmatprep.subr.bf16.mxu0 0
          %879 = vmatpush2.bf16.msra.mxu0 0
          %880 = vmatprep.subr.bf16.mxu0 0
          %881 = vmatpush2.bf16.msra.mxu0 0
          %882 = vmatprep.subr.bf16.mxu0 0
          %883 = vmatpush2.bf16.msra.mxu0 0
          %884 = vmatprep.subr.bf16.mxu0 0
          %885 = vmatpush2.bf16.msra.mxu0 0
          %886 = vmatprep.subr.bf16.mxu0 0
          %887 = vmatpush2.bf16.msra.mxu0 0
          %888 = vmatprep.subr.bf16.mxu0 0
          %889 = vmatpush2.bf16.msra.mxu0 0
          %890 = vmatprep.subr.bf16.mxu0 0
          %891 = vmatpush2.bf16.msra.mxu0 0
          %892 = vmatprep.subr.bf16.mxu0 0
          %893 = vmatpush2.bf16.msra.mxu0 0
          %894 = vmatprep.mubr.bf16.mxu0 0
          %895 = vmatmul.mubr.bf16.gmra.mxu0 %v860
          %v896 = vpop.f32.mrf.mxu0
          %v897 = vadd.f32 %v845, %v896
          %v898 = vpop.f32.mrf.mxu0
          %v899 = vpop.f32.mrf.mxu0
          %v900 = vpop.f32.mrf.mxu0
          %901 = vdwg.mxu0
          %v902 = vsel %vm813, %v897, 0.0
          %903 = vadd.xlane.f32.xlu0 %v902
          %v904 = vpop.xlane.xlu0 %903
          %v905 = vmul.f32 %v897, %v897
          %v906 = vsel %vm813, %v905, 0.0
          %907 = vadd.xlane.f32.xlu0 %v906
          %v908 = vpop.xlane.xlu0 %907
          %v909 = vmul.f32 %v904, 0.03125
          %v910 = vmul.f32 %v908, 0.03125
          %v911 = vmul.f32 %v909, %v909
          %v912 = vsub.f32 %v910, %v911
          %v913 = vmax.f32 %v912, 0.0
          %v914 = vsub.f32 %v897, %v909
          %v915 = vadd.f32 %v913, 1e-06
          %v916 = vrsqrt.pop %v915
          %v917 = vmul.f32 %v914, %v916
          %v918 = vmul.f32 %v917, 0.5
          %v919 = vtanh.pop %v918
          %v920 = vmul.f32 %v919, 0.5
          %v921 = vadd.f32 %v920, 0.5
          %v922 = vmul.f32 %v917, %v921
          %v923 = vpack.c.bf16 %v922, %v922
          %v924 = vld [vmem:[%s528] sm:$0xf]
          %v925 = vld [vmem:[%s528 + $0x4] sm:$0xf]
          %v926 = vld [vmem:[%s528 + $0x8] sm:$0xf]
          %v927 = vld [vmem:[%s528 + $0xc] sm:$0xf]
          %v928 = vld [vmem:[%s536] sm:$0x1]
          %v930 = vlaneseq
          %v931 = vshrl.u32 %v930, 7
          %v932 = vsub.s32 0, %v931
          %v933 = vrot.slane %v928, %v932
          %v939 = vunpack.c.l.b16 %v924
          %v940 = vunpack.c.l.b16 %v925
          %v941 = vunpack.c.l.b16 %v926
          %v942 = vunpack.c.l.b16 %v927
          %v943 = vpack.c.b16 %v940, %v939
          %v944 = vpack.c.b16 %v942, %v941
          %v948 = vsel %vm813, %v923, 0
          %950 = vmatprep.subr.bf16.mxu0 0
          %951 = vmatpush1.bf16.msra.mxu0 0
          %952 = vmatprep.subr.bf16.mxu0 0
          %953 = vmatpush1.bf16.msra.mxu0 0
          %954 = vmatprep.subr.bf16.mxu0 0
          %955 = vmatpush1.bf16.msra.mxu0 0
          %956 = vmatprep.subr.bf16.mxu0 0
          %957 = vmatpush1.bf16.msra.mxu0 0
          %958 = vmatprep.subr.bf16.mxu0 0
          %959 = vmatpush1.bf16.msra.mxu0 0
          %960 = vmatprep.subr.bf16.mxu0 0
          %961 = vmatpush1.bf16.msra.mxu0 0
          %962 = vmatprep.subr.bf16.mxu0 0
          %963 = vmatpush1.bf16.msra.mxu0 %v944
          %964 = vmatprep.subr.bf16.mxu0 0
          %965 = vmatpush1.bf16.msra.mxu0 %v943
          %966 = vmatprep.subr.bf16.mxu0 0
          %967 = vmatpush2.bf16.msra.mxu0 0
          %968 = vmatprep.subr.bf16.mxu0 0
          %969 = vmatpush2.bf16.msra.mxu0 0
          %970 = vmatprep.subr.bf16.mxu0 0
          %971 = vmatpush2.bf16.msra.mxu0 0
          %972 = vmatprep.subr.bf16.mxu0 0
          %973 = vmatpush2.bf16.msra.mxu0 0
          %974 = vmatprep.subr.bf16.mxu0 0
          %975 = vmatpush2.bf16.msra.mxu0 0
          %976 = vmatprep.subr.bf16.mxu0 0
          %977 = vmatpush2.bf16.msra.mxu0 0
          %978 = vmatprep.subr.bf16.mxu0 0
          %979 = vmatpush2.bf16.msra.mxu0 0
          %980 = vmatprep.subr.bf16.mxu0 0
          %981 = vmatpush2.bf16.msra.mxu0 0
          %982 = vmatprep.mubr.bf16.mxu0 0
          %983 = vmatmul.mubr.bf16.gmra.mxu0 %v948
          %v984 = vpop.f32.mrf.mxu0
          %v985 = vadd.f32 %v933, %v984
          %v986 = vpop.f32.mrf.mxu0
          %v987 = vpop.f32.mrf.mxu0
          %v988 = vpop.f32.mrf.mxu0
          %989 = vdwg.mxu0
          %v990 = vadd.f32 %v812, %v985
          %991 = vst.msk [vmem:[#allocation2] sm:$0xff] %vm813, %v990
        $region100: #{tpu_custom_call.1} parent=63 // pred_fallthru
          _
        %p992 = scmp.eq.s32.totalorder %s31, 3
        // Predicated region
        $region101: #{tpu_custom_call.1} parent=63 // pred_check
          %p993 = pneg %p992
        $region102: #{tpu_custom_call.1} parent=63 // pred_check_branch
          %995 = sbr.rel (%p993) target = $region104
        $region103: #{tpu_custom_call.1} parent=63 // pred_region
          %v996 = vld [vmem:[#allocation2] sm:$0xff]
          %v997 = vpack.c.bf16 %v996, %v996
          %v998 = vld [vmem:[%s9] sm:$0xf]
          %v999 = vld [vmem:[%s9 + $0x4] sm:$0xf]
          %v1000 = vld [vmem:[%s9 + $0x8] sm:$0xf]
          %v1001 = vld [vmem:[%s9 + $0xc] sm:$0xf]
          %v1002 = vld [vmem:[%s10] sm:$0x1]
          %v1004 = vlaneseq
          %v1005 = vshrl.u32 %v1004, 7
          %v1006 = vsub.s32 0, %v1005
          %v1007 = vrot.slane %v1002, %v1006
          %v1013 = vunpack.c.l.b16 %v998
          %v1014 = vunpack.c.l.b16 %v999
          %v1015 = vunpack.c.l.b16 %v1000
          %v1016 = vunpack.c.l.b16 %v1001
          %v1017 = vpack.c.b16 %v1014, %v1013
          %v1018 = vpack.c.b16 %v1016, %v1015
          %vm1021 = vcmask 261120
          %v1023 = vsel %vm1021, %v997, 0
          %1025 = vmatprep.subr.bf16.mxu0 0
          %1026 = vmatpush1.bf16.msra.mxu0 0
          %1027 = vmatprep.subr.bf16.mxu0 0
          %1028 = vmatpush1.bf16.msra.mxu0 0
          %1029 = vmatprep.subr.bf16.mxu0 0
          %1030 = vmatpush1.bf16.msra.mxu0 0
          %1031 = vmatprep.subr.bf16.mxu0 0
          %1032 = vmatpush1.bf16.msra.mxu0 0
          %1033 = vmatprep.subr.bf16.mxu0 0
          %1034 = vmatpush1.bf16.msra.mxu0 0
          %1035 = vmatprep.subr.bf16.mxu0 0
          %1036 = vmatpush1.bf16.msra.mxu0 0
          %1037 = vmatprep.subr.bf16.mxu0 0
          %1038 = vmatpush1.bf16.msra.mxu0 %v1018
          %1039 = vmatprep.subr.bf16.mxu0 0
          %1040 = vmatpush1.bf16.msra.mxu0 %v1017
          %1041 = vmatprep.subr.bf16.mxu0 0
          %1042 = vmatpush2.bf16.msra.mxu0 0
          %1043 = vmatprep.subr.bf16.mxu0 0
          %1044 = vmatpush2.bf16.msra.mxu0 0
          %1045 = vmatprep.subr.bf16.mxu0 0
          %1046 = vmatpush2.bf16.msra.mxu0 0
          %1047 = vmatprep.subr.bf16.mxu0 0
          %1048 = vmatpush2.bf16.msra.mxu0 0
          %1049 = vmatprep.subr.bf16.mxu0 0
          %1050 = vmatpush2.bf16.msra.mxu0 0
          %1051 = vmatprep.subr.bf16.mxu0 0
          %1052 = vmatpush2.bf16.msra.mxu0 0
          %1053 = vmatprep.subr.bf16.mxu0 0
          %1054 = vmatpush2.bf16.msra.mxu0 0
          %1055 = vmatprep.subr.bf16.mxu0 0
          %1056 = vmatpush2.bf16.msra.mxu0 0
          %1057 = vmatprep.mubr.bf16.mxu0 0
          %1058 = vmatmul.mubr.bf16.gmra.mxu0 %v1023
          %v1059 = vpop.f32.mrf.mxu0
          %v1060 = vadd.f32 %v1007, %v1059
          %v1061 = vpop.f32.mrf.mxu0
          %v1062 = vpop.f32.mrf.mxu0
          %v1063 = vpop.f32.mrf.mxu0
          %1064 = vdwg.mxu0
          %1065 = vst [vmem:[#allocation14] sm:$0xff] %v1060
        $region104: #{tpu_custom_call.1} parent=63 // pred_fallthru
          _
        // Predicated region
        $region105: #{tpu_custom_call.1} parent=63 // pred_check
          %p1066 = pneg %p336
        $region106: #{tpu_custom_call.1} parent=63 // pred_check_branch
          %1068 = sbr.rel (%p1066) target = $region108
        $region107: #{tpu_custom_call.1} parent=63 // pred_region
          %s1070 = ssub.s32 128, 128
          %1071 = vsyncadd [#allocation5], %s1070
          %s1072 = smul.addr %s30, 128
          %s1073 = scalar_lea.hbm %s11, %s1072
          %s1075 = sshll.u32 [#allocation14], 4
          %s1076 = int_to_ptr.vmem [resolvable:$true] %s1075
          %1078 = dma.vmem_to_hbm [thread:$0]  %s1076, 128, %s1073, [#allocation5]
        $region108: #{tpu_custom_call.1} parent=63 // pred_fallthru
          _
        // Predicated region
        $region109: #{tpu_custom_call.1} parent=63 // pred_check
          %p1079 = pneg %p336
        $region110: #{tpu_custom_call.1} parent=63 // pred_check_branch
          %1081 = sbr.rel (%p1079) target = $region112
        $region111: #{tpu_custom_call.1} parent=63 // pred_region
          %1082 = dma.done [#allocation5], 128
        $region112: #{tpu_custom_call.1} parent=63 // pred_fallthru
          _
      $region64: #{tpu_custom_call.1} parent=5 // pred_fallthru
        _
      %p1083 = scmp.le.s32.totalorder 2, %s21
      // Predicated region
      $region113: #{tpu_custom_call.1} parent=5 // pred_check
        %p1084 = pneg %p1083
      $region114: #{tpu_custom_call.1} parent=5 // pred_check_branch
        %1086 = sbr.rel (%p1084) target = $region116
      $region115: #{tpu_custom_call.1} parent=5 // pred_region
        %s1087 = ssub.s32 %s21, 2
      $region116: #{tpu_custom_call.1} parent=5 // pred_fallthru
        _
    $region6: #{tpu_custom_call.1} parent=1 // loop_footer
      %s25 = sadd.s32 1, %s21
    $region7: #{tpu_custom_call.1} parent=1 // loop_footer_branch
      %20 = sbr.rel target = $region3
    $region8: #{tpu_custom_call.1} parent=1 // loop_exit
      _
    %1088 = vsyncpa [#allocation4], 1
    %s1089 = scalar_lea.sflag [#allocation4], 1
    %1090 = vsyncpa %s1089, 1
    %1091 = vsyncpa [#allocation7], 1
    %1092 = vsyncpa [#allocation10], 1
    %1093 = vsyncpa [#allocation5], 1
    %s1094 = scalar_lea.sflag [#allocation5], 1
    %1095 = vsyncpa %s1094, 1

// kernel: tpu_custom_call.1
$region0: #{tpu_custom_call.1}
  #allocation0 [shape = 'u32[]', space=smem, size = 0x4, offset = 0x4, fixed_abs, tag = 'smem constant byte address 0x4 - core index']
  #allocation1 [shape = 'u32[144,128]{1,0:T(1,128)}', space=vmem, size = 0x12000, scoped, tag = 'internal scratch']
  #allocation2 [shape = 'f32[8,32]{1,0:T(8,128)}', space=vmem, size = 0x1000, scoped, tag = 'scratch operand']
  %s0 = inlined_call_operand.hbm [shape: bf16[8,64], index: 0, kind: input, shape index: {}]
  %s1 = inlined_call_operand.vmem [shape: bf16[64,32], index: 1, kind: input, shape index: {}]
  %s2 = inlined_call_operand.hbm [shape: f32[1,32], index: 2, kind: input, shape index: {}]
  %s3 = inlined_call_operand.hbm [shape: bf16[32,32], index: 3, kind: input, shape index: {}]
  %s4 = inlined_call_operand.hbm [shape: f32[1,32], index: 4, kind: input, shape index: {}]
  %s5 = inlined_call_operand.vmem [shape: bf16[3,32,32], index: 5, kind: input, shape index: {}]
  %s6 = inlined_call_operand.hbm [shape: f32[3,1,32], index: 6, kind: input, shape index: {}]
  %s7 = inlined_call_operand.hbm [shape: bf16[3,32,32], index: 7, kind: input, shape index: {}]
  %s8 = inlined_call_operand.hbm [shape: f32[3,1,32], index: 8, kind: input, shape index: {}]
  %s9 = inlined_call_operand.vmem [shape: bf16[32,128], index: 9, kind: input, shape index: {}]
  %s10 = inlined_call_operand.vmem [shape: f32[1,128], index: 10, kind: input, shape index: {}]
  %s11 = inlined_call_operand.hbm [shape: f32[8,128], index: 11, kind: output, shape index: {}]
  %s12 = sld [smem:[#allocation0]]
  $region117: #{tpu_custom_call.1} parent=0
    _
  %s14 = ssub.s32 1, %s12
  %s15 = scalar_select 0, %s14, %s12
  $region1: #{tpu_custom_call.1} parent=0
    #allocation3 [shape = 'u8[2048]{0}', space=vmem, size = 0x800, scoped, tag = 'input window, operand 0, single buffered']
    #allocation4 [shape = 's32[2]{0}', space=sflag, size = 0x8, scoped, tag = 'scoped memory for tpu_custom_call.1']
    #allocation5 [shape = 's32[2]{0}', space=sflag, size = 0x8, scoped, tag = 'scoped memory for tpu_custom_call.1']
    #allocation6 [shape = 'u8[512]{0}', space=vmem, size = 0x400, scoped, tag = 'input window, operand 2, single buffered']
    #allocation7 [shape = 's32[1]{0}', space=sflag, size = 0x4, scoped, tag = 'scoped memory for tpu_custom_call.1']
    #allocation8 [shape = 'u8[8192]{0}', space=vmem, size = 0x2000, scoped, tag = 'input window, operand 3, single buffered']
    #allocation9 [shape = 'u8[512]{0}', space=vmem, size = 0x400, scoped, tag = 'input window, operand 4, single buffered']
    #allocation10 [shape = 's32[1]{0}', space=sflag, size = 0x4, scoped, tag = 'scoped memory for tpu_custom_call.1']
    #allocation11 [shape = 'u8[1024]{0}', space=vmem, size = 0x400, scoped, tag = 'input window, operand 6']
    #allocation12 [shape = 'u8[16384]{0}', space=vmem, size = 0x4000, scoped, tag = 'input window, operand 7']
    #allocation13 [shape = 'u8[1024]{0}', space=vmem, size = 0x400, scoped, tag = 'input window, operand 8']
    #allocation14 [shape = 'u8[4096]{0}', space=vmem, size = 0x1000, scoped, tag = 'output window, operand 0, single buffered']
    %16 = vsyncpa [#allocation4], 0
    %17 = vsyncpa [#allocation7], 0
    %18 = vsyncpa [#allocation10], 0
    %19 = vsyncpa [#allocation5], 0
    loop: start=0, step=1, limit=6
    $region2: #{tpu_custom_call.1} parent=1 // loop_pre_header
      _
    $region3: #{tpu_custom_call.1} parent=1 // loop_header
      %s21 = sphi 0, %s25
      %p22 = scmp.ge.s32.totalorder %s21, 6
      %s28 = sphi 0, %s40
      %s29 = sphi 0, %s36
      %s30 = sphi 0, %s28
      %s31 = sphi 0, %s29
      %s32 = sphi 0, %s30
      %s33 = sphi 0, %s31
      %s43 = sphi 0, %s45
      %s46 = sphi 0, %s43
      %s47 = sphi 0, %s46
      %s63 = sphi 0, %s47
      %s67 = sphi 0, %s67
      %s69 = sphi 0, %s67
      %s70 = sphi 0, %s69
      %s84 = sphi 0, %s70
      %s88 = sphi 0, %s88
      %s90 = sphi 0, %s88
      %s91 = sphi 0, %s90
      %s105 = sphi 0, %s91
      %s109 = sphi 0, %s109
      %s111 = sphi 0, %s109
      %s112 = sphi 0, %s111
      %s126 = sphi 0, %s112
      %s130 = sphi 0, %s130
      %s132 = sphi 0, %s130
      %s133 = sphi 0, %s132
      %s147 = sphi 0, %s133
      %s159 = sphi 0, %s161
      %s162 = sphi 0, %s159
      %s163 = sphi 0, %s162
      %s179 = sphi 0, %s163
      %s191 = sphi 0, %s193
      %s194 = sphi 0, %s191
      %s195 = sphi 0, %s194
      %s211 = sphi 0, %s195
      %s223 = sphi 0, %s225
      %s226 = sphi 0, %s223
      %s227 = sphi 0, %s226
      %s243 = sphi 0, %s227
      %s255 = sphi 0, %s257
      %s258 = sphi 0, %s255
      %s259 = sphi 0, %s258
      %s275 = sphi 0, %s259
      %s279 = sphi 0, %s279
      %s281 = sphi 0, %s279
      %s282 = sphi 0, %s281
      %s296 = sphi 0, %s282
      %s300 = sphi 0, %s300
      %s302 = sphi 0, %s300
      %s303 = sphi 0, %s302
      %s317 = sphi 0, %s303
      %s323 = sphi 0, %s325
      %s326 = sphi 0, %s323
      %s327 = sphi 0, %s326
      %s343 = sphi 0, %s327
    $region4: #{tpu_custom_call.1} parent=1 // loop_header_branch
      %24 = sbr.rel (%p22) target = $region8
    $region5: #{tpu_custom_call.1} parent=1 // loop_body
      %s26 = ssub.s32 %s21, 1
      %s27 = ssub.s32 %s21, 2
      %s34 = sadd.s32 1, %s29
      %p35 = scmp.ge.s32.totalorder %s34, 4
      %s36 = scalar_select %p35, 0, %s34
      %s37 = sadd.s32 1, %s28
      %s38 = scalar_select %p35, %s37, %s28
      %p39 = scmp.ge.s32.totalorder %s38, 1
      %s40 = scalar_select %p39, 0, %s38
      %s41 = ssub.s32 %s28, %s40
      %p42 = scmp.eq.s32.totalorder %s41, 0
      %s44 = sadd.s32 %s43, 1
      %s45 = scalar_select %p42, %s43, %s44
      %p48 = pneg %p42
      %p49 = scmp.eq.s32.totalorder %s21, 3
      %p50 = por %p48, %p49
      %p51 = scmp.ne.s32.totalorder %s43, %s46
      %p52 = scmp.eq.s32.totalorder %s21, 0
      %p53 = por %p51, %p52
      %p54 = scmp.ne.s32.totalorder %s43, %s46
      %p55 = scmp.eq.s32.totalorder %s26, 3
      %p56 = por %p54, %p55
      %p57 = scmp.ne.s32.totalorder %s46, %s47
      %p58 = scmp.eq.s32.totalorder %s26, 0
      %p59 = por %p57, %p58
      %p60 = scmp.ne.s32.totalorder %s46, %s47
      %p61 = scmp.eq.s32.totalorder %s27, 3
      %p62 = por %p60, %p61
      %p64 = scmp.ne.s32.totalorder %s47, %s63
      %p65 = scmp.eq.s32.totalorder %s27, 0
      %p66 = por %p64, %p65
      %s68 = sadd.s32 %s67, 1
      %p71 = scmp.eq.s32.totalorder %s21, 3
      %p72 = scmp.ne.s32.totalorder %s67, %s69
      %p73 = scmp.eq.s32.totalorder %s21, 0
      %p74 = por %p72, %p73
      %p75 = scmp.ne.s32.totalorder %s67, %s69
      %p76 = scmp.eq.s32.totalorder %s26, 3
      %p77 = por %p75, %p76
      %p78 = scmp.ne.s32.totalorder %s69, %s70
      %p79 = scmp.eq.s32.totalorder %s26, 0
      %p80 = por %p78, %p79
      %p81 = scmp.ne.s32.totalorder %s69, %s70
      %p82 = scmp.eq.s32.totalorder %s27, 3
      %p83 = por %p81, %p82
      %p85 = scmp.ne.s32.totalorder %s70, %s84
      %p86 = scmp.eq.s32.totalorder %s27, 0
      %p87 = por %p85, %p86
      %s89 = sadd.s32 %s88, 1
      %p92 = scmp.eq.s32.totalorder %s21, 3
      %p93 = scmp.ne.s32.totalorder %s88, %s90
      %p94 = scmp.eq.s32.totalorder %s21, 0
      %p95 = por %p93, %p94
      %p96 = scmp.ne.s32.totalorder %s88, %s90
      %p97 = scmp.eq.s32.totalorder %s26, 3
      %p98 = por %p96, %p97
      %p99 = scmp.ne.s32.totalorder %s90, %s91
      %p100 = scmp.eq.s32.totalorder %s26, 0
      %p101 = por %p99, %p100
      %p102 = scmp.ne.s32.totalorder %s90, %s91
      %p103 = scmp.eq.s32.totalorder %s27, 3
      %p104 = por %p102, %p103
      %p106 = scmp.ne.s32.totalorder %s91, %s105
      %p107 = scmp.eq.s32.totalorder %s27, 0
      %p108 = por %p106, %p107
      %s110 = sadd.s32 %s109, 1
      %p113 = scmp.eq.s32.totalorder %s21, 3
      %p114 = scmp.ne.s32.totalorder %s109, %s111
      %p115 = scmp.eq.s32.totalorder %s21, 0
      %p116 = por %p114, %p115
      %p117 = scmp.ne.s32.totalorder %s109, %s111
      %p118 = scmp.eq.s32.totalorder %s26, 3
      %p119 = por %p117, %p118
      %p120 = scmp.ne.s32.totalorder %s111, %s112
      %p121 = scmp.eq.s32.totalorder %s26, 0
      %p122 = por %p120, %p121
      %p123 = scmp.ne.s32.totalorder %s111, %s112
      %p124 = scmp.eq.s32.totalorder %s27, 3
      %p125 = por %p123, %p124
      %p127 = scmp.ne.s32.totalorder %s112, %s126
      %p128 = scmp.eq.s32.totalorder %s27, 0
      %p129 = por %p127, %p128
      %s131 = sadd.s32 %s130, 1
      %p134 = scmp.eq.s32.totalorder %s21, 3
      %p135 = scmp.ne.s32.totalorder %s130, %s132
      %p136 = scmp.eq.s32.totalorder %s21, 0
      %p137 = por %p135, %p136
      %p138 = scmp.ne.s32.totalorder %s130, %s132
      %p139 = scmp.eq.s32.totalorder %s26, 3
      %p140 = por %p138, %p139
      %p141 = scmp.ne.s32.totalorder %s132, %s133
      %p142 = scmp.eq.s32.totalorder %s26, 0
      %p143 = por %p141, %p142
      %p144 = scmp.ne.s32.totalorder %s132, %s133
      %p145 = scmp.eq.s32.totalorder %s27, 3
      %p146 = por %p144, %p145
      %p148 = scmp.ne.s32.totalorder %s133, %s147
      %p149 = scmp.eq.s32.totalorder %s27, 0
      %p150 = por %p148, %p149
      %s151 = ssub.s32 %s29, 1
      %p152 = scmp.gt.s32.totalorder %s151, 0
      %s153 = scalar_select %p152, %s151, 0
      %s154 = ssub.s32 %s36, 1
      %p155 = scmp.gt.s32.totalorder %s154, 0
      %s156 = scalar_select %p155, %s154, 0
      %s157 = ssub.s32 %s153, %s156
      %p158 = scmp.eq.s32.totalorder %s157, 0
      %s160 = sadd.s32 %s159, 1
      %s161 = scalar_select %p158, %s159, %s160
      %p164 = pneg %p158
      %p165 = scmp.eq.s32.totalorder %s21, 3
      %p166 = por %p164, %p165
      %p167 = scmp.ne.s32.totalorder %s159, %s162
      %p168 = scmp.eq.s32.totalorder %s21, 0
      %p169 = por %p167, %p168
      %p170 = scmp.ne.s32.totalorder %s159, %s162
      %p171 = scmp.eq.s32.totalorder %s26, 3
      %p172 = por %p170, %p171
      %p173 = scmp.ne.s32.totalorder %s162, %s163
      %p174 = scmp.eq.s32.totalorder %s26, 0
      %p175 = por %p173, %p174
      %p176 = scmp.ne.s32.totalorder %s162, %s163
      %p177 = scmp.eq.s32.totalorder %s27, 3
      %p178 = por %p176, %p177
      %p180 = scmp.ne.s32.totalorder %s163, %s179
      %p181 = scmp.eq.s32.totalorder %s27, 0
      %p182 = por %p180, %p181
      %s183 = ssub.s32 %s29, 1
      %p184 = scmp.gt.s32.totalorder %s183, 0
      %s185 = scalar_select %p184, %s183, 0
      %s186 = ssub.s32 %s36, 1
      %p187 = scmp.gt.s32.totalorder %s186, 0
      %s188 = scalar_select %p187, %s186, 0
      %s189 = ssub.s32 %s185, %s188
      %p190 = scmp.eq.s32.totalorder %s189, 0
      %s192 = sadd.s32 %s191, 1
      %s193 = scalar_select %p190, %s191, %s192
      %p196 = pneg %p190
      %p197 = scmp.eq.s32.totalorder %s21, 3
      %p198 = por %p196, %p197
      %p199 = scmp.ne.s32.totalorder %s191, %s194
      %p200 = scmp.eq.s32.totalorder %s21, 0
      %p201 = por %p199, %p200
      %p202 = scmp.ne.s32.totalorder %s191, %s194
      %p203 = scmp.eq.s32.totalorder %s26, 3
      %p204 = por %p202, %p203
      %p205 = scmp.ne.s32.totalorder %s194, %s195
      %p206 = scmp.eq.s32.totalorder %s26, 0
      %p207 = por %p205, %p206
      %p208 = scmp.ne.s32.totalorder %s194, %s195
      %p209 = scmp.eq.s32.totalorder %s27, 3
      %p210 = por %p208, %p209
      %p212 = scmp.ne.s32.totalorder %s195, %s211
      %p213 = scmp.eq.s32.totalorder %s27, 0
      %p214 = por %p212, %p213
      %s215 = ssub.s32 %s29, 1
      %p216 = scmp.gt.s32.totalorder %s215, 0
      %s217 = scalar_select %p216, %s215, 0
      %s218 = ssub.s32 %s36, 1
      %p219 = scmp.gt.s32.totalorder %s218, 0
      %s220 = scalar_select %p219, %s218, 0
      %s221 = ssub.s32 %s217, %s220
      %p222 = scmp.eq.s32.totalorder %s221, 0
      %s224 = sadd.s32 %s223, 1
      %s225 = scalar_select %p222, %s223, %s224
      %p228 = pneg %p222
      %p229 = scmp.eq.s32.totalorder %s21, 3
      %p230 = por %p228, %p229
      %p231 = scmp.ne.s32.totalorder %s223, %s226
      %p232 = scmp.eq.s32.totalorder %s21, 0
      %p233 = por %p231, %p232
      %p234 = scmp.ne.s32.totalorder %s223, %s226
      %p235 = scmp.eq.s32.totalorder %s26, 3
      %p236 = por %p234, %p235
      %p237 = scmp.ne.s32.totalorder %s226, %s227
      %p238 = scmp.eq.s32.totalorder %s26, 0
      %p239 = por %p237, %p238
      %p240 = scmp.ne.s32.totalorder %s226, %s227
      %p241 = scmp.eq.s32.totalorder %s27, 3
      %p242 = por %p240, %p241
      %p244 = scmp.ne.s32.totalorder %s227, %s243
      %p245 = scmp.eq.s32.totalorder %s27, 0
      %p246 = por %p244, %p245
      %s247 = ssub.s32 %s29, 1
      %p248 = scmp.gt.s32.totalorder %s247, 0
      %s249 = scalar_select %p248, %s247, 0
      %s250 = ssub.s32 %s36, 1
      %p251 = scmp.gt.s32.totalorder %s250, 0
      %s252 = scalar_select %p251, %s250, 0
      %s253 = ssub.s32 %s249, %s252
      %p254 = scmp.eq.s32.totalorder %s253, 0
      %s256 = sadd.s32 %s255, 1
      %s257 = scalar_select %p254, %s255, %s256
      %p260 = pneg %p254
      %p261 = scmp.eq.s32.totalorder %s21, 3
      %p262 = por %p260, %p261
      %p263 = scmp.ne.s32.totalorder %s255, %s258
      %p264 = scmp.eq.s32.totalorder %s21, 0
      %p265 = por %p263, %p264
      %p266 = scmp.ne.s32.totalorder %s255, %s258
      %p267 = scmp.eq.s32.totalorder %s26, 3
      %p268 = por %p266, %p267
      %p269 = scmp.ne.s32.totalorder %s258, %s259
      %p270 = scmp.eq.s32.totalorder %s26, 0
      %p271 = por %p269, %p270
      %p272 = scmp.ne.s32.totalorder %s258, %s259
      %p273 = scmp.eq.s32.totalorder %s27, 3
      %p274 = por %p272, %p273
      %p276 = scmp.ne.s32.totalorder %s259, %s275
      %p277 = scmp.eq.s32.totalorder %s27, 0
      %p278 = por %p276, %p277
      %s280 = sadd.s32 %s279, 1
      %p283 = scmp.eq.s32.totalorder %s21, 3
      %p284 = scmp.ne.s32.totalorder %s279, %s281
      %p285 = scmp.eq.s32.totalorder %s21, 0
      %p286 = por %p284, %p285
      %p287 = scmp.ne.s32.totalorder %s279, %s281
      %p288 = scmp.eq.s32.totalorder %s26, 3
      %p289 = por %p287, %p288
      %p290 = scmp.ne.s32.totalorder %s281, %s282
      %p291 = scmp.eq.s32.totalorder %s26, 0
      %p292 = por %p290, %p291
      %p293 = scmp.ne.s32.totalorder %s281, %s282
      %p294 = scmp.eq.s32.totalorder %s27, 3
      %p295 = por %p293, %p294
      %p297 = scmp.ne.s32.totalorder %s282, %s296
      %p298 = scmp.eq.s32.totalorder %s27, 0
      %p299 = por %p297, %p298
      %s301 = sadd.s32 %s300, 1
      %p304 = scmp.eq.s32.totalorder %s21, 3
      %p305 = scmp.ne.s32.totalorder %s300, %s302
      %p306 = scmp.eq.s32.totalorder %s21, 0
      %p307 = por %p305, %p306
      %p308 = scmp.ne.s32.totalorder %s300, %s302
      %p309 = scmp.eq.s32.totalorder %s26, 3
      %p310 = por %p308, %p309
      %p311 = scmp.ne.s32.totalorder %s302, %s303
      %p312 = scmp.eq.s32.totalorder %s26, 0
      %p313 = por %p311, %p312
      %p314 = scmp.ne.s32.totalorder %s302, %s303
      %p315 = scmp.eq.s32.totalorder %s27, 3
      %p316 = por %p314, %p315
      %p318 = scmp.ne.s32.totalorder %s303, %s317
      %p319 = scmp.eq.s32.totalorder %s27, 0
      %p320 = por %p318, %p319
      %s321 = ssub.s32 %s28, %s40
      %p322 = scmp.eq.s32.totalorder %s321, 0
      %s324 = sadd.s32 %s323, 1
      %s325 = scalar_select %p322, %s323, %s324
      %p328 = pneg %p322
      %p329 = scmp.eq.s32.totalorder %s21, 3
      %p330 = por %p328, %p329
      %p331 = scmp.ne.s32.totalorder %s323, %s326
      %p332 = scmp.eq.s32.totalorder %s21, 0
      %p333 = por %p331, %p332
      %p334 = scmp.ne.s32.totalorder %s323, %s326
      %p335 = scmp.eq.s32.totalorder %s26, 3
      %p336 = por %p334, %p335
      %p337 = scmp.ne.s32.totalorder %s326, %s327
      %p338 = scmp.eq.s32.totalorder %s26, 0
      %p339 = por %p337, %p338
      %p340 = scmp.ne.s32.totalorder %s326, %s327
      %p341 = scmp.eq.s32.totalorder %s27, 3
      %p342 = por %p340, %p341
      %p344 = scmp.ne.s32.totalorder %s327, %s343
      %p345 = scmp.eq.s32.totalorder %s27, 0
      %p346 = por %p344, %p345
      %p347 = scmp.le.s32.totalorder 1, %s21
      %p348 = scmp.lt.s32.totalorder %s21, 5
      %p349 = pnand %p347, %p348
      %p350 = pneg %p349
      // Predicated region
      $region9: #{tpu_custom_call.1} parent=5 // pred_check
        _
      $region10: #{tpu_custom_call.1} parent=5 // pred_check_branch
        %352 = sbr.rel (%p349) target = $region12
      $region11: #{tpu_custom_call.1} parent=5 // pred_region
        %s353 = ssub.s32 %s21, 1
        // Predicated region
        $region13: #{tpu_custom_call.1} parent=11 // pred_check
          %p354 = pneg %p59
        $region14: #{tpu_custom_call.1} parent=11 // pred_check_branch
          %356 = sbr.rel (%p354) target = $region16
        $region15: #{tpu_custom_call.1} parent=11 // pred_region
          %s358 = ssub.s32 64, 64
          %359 = vsyncadd [#allocation4], %s358
          %s360 = smul.addr %s30, 64
          %s361 = scalar_lea.hbm %s0, %s360
          %s363 = sshll.u32 [#allocation3], 4
          %s364 = int_to_ptr.vmem [resolvable:$true] %s363
          %366 = dma.hbm_to_vmem [thread:$0]  %s361, 64, %s364, [#allocation4]
        $region16: #{tpu_custom_call.1} parent=11 // pred_fallthru
          _
        // Predicated region
        $region17: #{tpu_custom_call.1} parent=11 // pred_check
          %p367 = pneg %p80
        $region18: #{tpu_custom_call.1} parent=11 // pred_check_branch
          %369 = sbr.rel (%p367) target = $region20
        $region19: #{tpu_custom_call.1} parent=11 // pred_region
          _
        $region20: #{tpu_custom_call.1} parent=11 // pred_fallthru
          _
        // Predicated region
        $region21: #{tpu_custom_call.1} parent=11 // pred_check
          %p370 = pneg %p101
        $region22: #{tpu_custom_call.1} parent=11 // pred_check_branch
          %372 = sbr.rel (%p370) target = $region24
        $region23: #{tpu_custom_call.1} parent=11 // pred_region
          %s374 = ssub.s32 16, 16
          %375 = vsyncadd [#allocation7], %s374
          %s377 = sshll.u32 [#allocation6], 4
          %s378 = int_to_ptr.vmem [resolvable:$true] %s377
          %380 = dma.hbm_to_vmem [thread:$0]  %s2, 16, %s378, [#allocation7]
        $region24: #{tpu_custom_call.1} parent=11 // pred_fallthru
          _
        // Predicated region
        $region25: #{tpu_custom_call.1} parent=11 // pred_check
          %p381 = pneg %p122
        $region26: #{tpu_custom_call.1} parent=11 // pred_check_branch
          %383 = sbr.rel (%p381) target = $region28
        $region27: #{tpu_custom_call.1} parent=11 // pred_region
          %s385 = ssub.s32 256, 256
          %386 = vsyncadd [#allocation7], %s385
          %s387 = sshll.u32 [#allocation8], 4
          %s388 = int_to_ptr.vmem [resolvable:$true] %s387
          %393 = dma.hbm_to_vmem [thread:$0]  %s3, 256, %s388, [#allocation7], 64, 64, 4
        $region28: #{tpu_custom_call.1} parent=11 // pred_fallthru
          _
        // Predicated region
        $region29: #{tpu_custom_call.1} parent=11 // pred_check
          %p394 = pneg %p143
        $region30: #{tpu_custom_call.1} parent=11 // pred_check_branch
          %396 = sbr.rel (%p394) target = $region32
        $region31: #{tpu_custom_call.1} parent=11 // pred_region
          %s398 = ssub.s32 16, 16
          %399 = vsyncadd [#allocation10], %s398
          %s401 = sshll.u32 [#allocation9], 4
          %s402 = int_to_ptr.vmem [resolvable:$true] %s401
          %404 = dma.hbm_to_vmem [thread:$0]  %s4, 16, %s402, [#allocation10]
        $region32: #{tpu_custom_call.1} parent=11 // pred_fallthru
          _
        // Predicated region
        $region33: #{tpu_custom_call.1} parent=11 // pred_check
          %p405 = pneg %p292
        $region34: #{tpu_custom_call.1} parent=11 // pred_check_branch
          %407 = sbr.rel (%p405) target = $region36
        $region35: #{tpu_custom_call.1} parent=11 // pred_region
          _
        $region36: #{tpu_custom_call.1} parent=11 // pred_fallthru
          _
        // Predicated region
        $region37: #{tpu_custom_call.1} parent=11 // pred_check
          %p408 = pneg %p313
        $region38: #{tpu_custom_call.1} parent=11 // pred_check_branch
          %410 = sbr.rel (%p408) target = $region40
        $region39: #{tpu_custom_call.1} parent=11 // pred_region
          _
        $region40: #{tpu_custom_call.1} parent=11 // pred_fallthru
          _
      $region12: #{tpu_custom_call.1} parent=5 // pred_fallthru
        _
      %p411 = scmp.lt.s32.totalorder %s21, 4
      // Predicated region
      $region41: #{tpu_custom_call.1} parent=5 // pred_check
        %p412 = pneg %p411
      $region42: #{tpu_custom_call.1} parent=5 // pred_check_branch
        %414 = sbr.rel (%p412) target = $region44
      $region43: #{tpu_custom_call.1} parent=5 // pred_region
        // Predicated region
        $region45: #{tpu_custom_call.1} parent=43 // pred_check
          %p415 = pneg %p169
        $region46: #{tpu_custom_call.1} parent=43 // pred_check_branch
          %417 = sbr.rel (%p415) target = $region48
        $region47: #{tpu_custom_call.1} parent=43 // pred_region
          %s418 = ssub.s32 %s29, 1
          %p419 = scmp.gt.s32.totalorder %s418, 0
          %s420 = scalar_select %p419, %s418, 0
          %p421 = scmp.lt.s32.totalorder %s420, 2
          %s422 = scalar_select %p421, %s420, 2
          %s423 = smul.addr %s422, 4
          %s424 = smul.addr %s423, 4
          %s425 = scalar_lea.vmem %s5, %s424
          %s426 = ssub.s32 %s29, 1
          %p427 = scmp.gt.s32.totalorder %s426, 0
          %s428 = scalar_select %p427, %s426, 0
        $region48: #{tpu_custom_call.1} parent=43 // pred_fallthru
          _
        // Predicated region
        $region49: #{tpu_custom_call.1} parent=43 // pred_check
          %p429 = pneg %p201
        $region50: #{tpu_custom_call.1} parent=43 // pred_check_branch
          %431 = sbr.rel (%p429) target = $region52
        $region51: #{tpu_custom_call.1} parent=43 // pred_region
          %s432 = sand.u32 %s21, 1
          %s433 = scalar_lea.sflag [#allocation4], %s432
          %s434 = sand.u32 %s191, 1
          %s435 = scalar_lea.vmem [#allocation11], %s434
          %s436 = ssub.s32 %s29, 1
          %p437 = scmp.gt.s32.totalorder %s436, 0
          %s438 = scalar_select %p437, %s436, 0
          %s440 = ssub.s32 16, 16
          %441 = vsyncadd %s433, %s440
          %s442 = smul.addr %s438, 16
          %s443 = scalar_lea.hbm %s6, %s442
          %s445 = sshll.u32 %s435, 4
          %s446 = int_to_ptr.vmem [resolvable:$true] %s445
          %448 = dma.hbm_to_vmem [thread:$0]  %s443, 16, %s446, %s433
        $region52: #{tpu_custom_call.1} parent=43 // pred_fallthru
          _
        // Predicated region
        $region53: #{tpu_custom_call.1} parent=43 // pred_check
          %p449 = pneg %p233
        $region54: #{tpu_custom_call.1} parent=43 // pred_check_branch
          %451 = sbr.rel (%p449) target = $region56
        $region55: #{tpu_custom_call.1} parent=43 // pred_region
          %s452 = sand.u32 %s21, 1
          %s453 = scalar_lea.sflag [#allocation4], %s452
          %s454 = sand.u32 %s223, 1
          %s455 = smul.addr %s454, 16
          %s456 = scalar_lea.vmem [#allocation12], %s455
          %s457 = ssub.s32 %s29, 1
          %p458 = scmp.gt.s32.totalorder %s457, 0
          %s459 = scalar_select %p458, %s457, 0
          %s461 = ssub.s32 256, 256
          %462 = vsyncadd %s453, %s461
          %s463 = smul.addr %s459, 4
          %s464 = smul.addr %s463, 64
          %s465 = scalar_lea.hbm %s7, %s464
          %s466 = sshll.u32 %s456, 4
          %s467 = int_to_ptr.vmem [resolvable:$true] %s466
          %472 = dma.hbm_to_vmem [thread:$0]  %s465, 256, %s467, %s453, 64, 64, 4
        $region56: #{tpu_custom_call.1} parent=43 // pred_fallthru
          _
        // Predicated region
        $region57: #{tpu_custom_call.1} parent=43 // pred_check
          %p473 = pneg %p265
        $region58: #{tpu_custom_call.1} parent=43 // pred_check_branch
          %475 = sbr.rel (%p473) target = $region60
        $region59: #{tpu_custom_call.1} parent=43 // pred_region
          %s476 = sand.u32 %s21, 1
          %s477 = scalar_lea.sflag [#allocation4], %s476
          %s478 = sand.u32 %s255, 1
          %s479 = scalar_lea.vmem [#allocation13], %s478
          %s480 = ssub.s32 %s29, 1
          %p481 = scmp.gt.s32.totalorder %s480, 0
          %s482 = scalar_select %p481, %s480, 0
          %s484 = ssub.s32 16, 16
          %485 = vsyncadd %s477, %s484
          %s486 = smul.addr %s482, 16
          %s487 = scalar_lea.hbm %s8, %s486
          %s489 = sshll.u32 %s479, 4
          %s490 = int_to_ptr.vmem [resolvable:$true] %s489
          %492 = dma.hbm_to_vmem [thread:$0]  %s487, 16, %s490, %s477
        $region60: #{tpu_custom_call.1} parent=43 // pred_fallthru
          _
      $region44: #{tpu_custom_call.1} parent=5 // pred_fallthru
        _
      %p493 = scmp.le.s32.totalorder 1, %s21
      %p494 = scmp.lt.s32.totalorder %s21, 5
      %p495 = pnand %p493, %p494
      %p496 = pneg %p495
      // Predicated region
      $region61: #{tpu_custom_call.1} parent=5 // pred_check
        _
      $region62: #{tpu_custom_call.1} parent=5 // pred_check_branch
        %498 = sbr.rel (%p495) target = $region64
      $region63: #{tpu_custom_call.1} parent=5 // pred_region
        %s499 = ssub.s32 %s21, 1
        // Predicated region
        $region65: #{tpu_custom_call.1} parent=63 // pred_check
          %p500 = pneg %p59
        $region66: #{tpu_custom_call.1} parent=63 // pred_check_branch
          %502 = sbr.rel (%p500) target = $region68
        $region67: #{tpu_custom_call.1} parent=63 // pred_region
          %503 = dma.done [#allocation4], 64
        $region68: #{tpu_custom_call.1} parent=63 // pred_fallthru
          _
        // Predicated region
        $region69: #{tpu_custom_call.1} parent=63 // pred_check
          %p504 = pneg %p101
        $region70: #{tpu_custom_call.1} parent=63 // pred_check_branch
          %506 = sbr.rel (%p504) target = $region72
        $region71: #{tpu_custom_call.1} parent=63 // pred_region
          %507 = dma.done [#allocation7], 16
        $region72: #{tpu_custom_call.1} parent=63 // pred_fallthru
          _
        // Predicated region
        $region73: #{tpu_custom_call.1} parent=63 // pred_check
          %p508 = pneg %p122
        $region74: #{tpu_custom_call.1} parent=63 // pred_check_branch
          %510 = sbr.rel (%p508) target = $region76
        $region75: #{tpu_custom_call.1} parent=63 // pred_region
          %511 = dma.done [#allocation7], 256
        $region76: #{tpu_custom_call.1} parent=63 // pred_fallthru
          _
        // Predicated region
        $region77: #{tpu_custom_call.1} parent=63 // pred_check
          %p512 = pneg %p143
        $region78: #{tpu_custom_call.1} parent=63 // pred_check_branch
          %514 = sbr.rel (%p512) target = $region80
        $region79: #{tpu_custom_call.1} parent=63 // pred_region
          %515 = dma.done [#allocation10], 16
        $region80: #{tpu_custom_call.1} parent=63 // pred_fallthru
          _
        %s516 = sand.u32 %s26, 1
        %s517 = scalar_lea.sflag [#allocation4], %s516
        %s518 = sand.u32 %s194, 1
        %s519 = scalar_lea.vmem [#allocation11], %s518
        // Predicated region
        $region81: #{tpu_custom_call.1} parent=63 // pred_check
          %p520 = pneg %p207
        $region82: #{tpu_custom_call.1} parent=63 // pred_check_branch
          %522 = sbr.rel (%p520) target = $region84
        $region83: #{tpu_custom_call.1} parent=63 // pred_region
          %523 = dma.done %s517, 16
        $region84: #{tpu_custom_call.1} parent=63 // pred_fallthru
          _
        %s524 = sand.u32 %s26, 1
        %s525 = scalar_lea.sflag [#allocation4], %s524
        %s526 = sand.u32 %s226, 1
        %s527 = smul.addr %s526, 16
        %s528 = scalar_lea.vmem [#allocation12], %s527
        // Predicated region
        $region85: #{tpu_custom_call.1} parent=63 // pred_check
          %p529 = pneg %p239
        $region86: #{tpu_custom_call.1} parent=63 // pred_check_branch
          %531 = sbr.rel (%p529) target = $region88
        $region87: #{tpu_custom_call.1} parent=63 // pred_region
          %532 = dma.done %s525, 256
        $region88: #{tpu_custom_call.1} parent=63 // pred_fallthru
          _
        %s533 = sand.u32 %s26, 1
        %s534 = scalar_lea.sflag [#allocation4], %s533
        %s535 = sand.u32 %s258, 1
        %s536 = scalar_lea.vmem [#allocation13], %s535
        // Predicated region
        $region89: #{tpu_custom_call.1} parent=63 // pred_check
          %p537 = pneg %p271
        $region90: #{tpu_custom_call.1} parent=63 // pred_check_branch
          %539 = sbr.rel (%p537) target = $region92
        $region91: #{tpu_custom_call.1} parent=63 // pred_region
          %540 = dma.done %s534, 16
        $region92: #{tpu_custom_call.1} parent=63 // pred_fallthru
          _
        %p541 = pneg %p59
        %p542 = pneg %p56
        %p543 = pneg %p80
        %p544 = pneg %p77
        %p545 = pneg %p101
        %p546 = pneg %p98
        %p547 = pneg %p122
        %p548 = pneg %p119
        %p549 = pneg %p143
        %p550 = pneg %p140
        %s551 = ssub.s32 %s31, 1
        %p552 = scmp.gt.s32.totalorder %s551, 0
        %s553 = scalar_select %p552, %s551, 0
        %p554 = scmp.lt.s32.totalorder %s553, 2
        %s555 = scalar_select %p554, %s553, 2
        %s556 = smul.addr %s555, 4
        %s557 = smul.addr %s556, 4
        %s558 = scalar_lea.vmem %s5, %s557
        %p559 = pneg %p175
        %p560 = pneg %p172
        %s561 = sand.u32 %s26, 1
        %s562 = scalar_lea.sflag [#allocation4], %s561
        %s563 = sand.u32 %s194, 1
        %s564 = scalar_lea.vmem [#allocation11], %s563
        %p565 = pneg %p207
        %p566 = pneg %p204
        %s567 = sand.u32 %s26, 1
        %s568 = scalar_lea.sflag [#allocation4], %s567
        %s569 = sand.u32 %s226, 1
        %s570 = smul.addr %s569, 16
        %s571 = scalar_lea.vmem [#allocation12], %s570
        %p572 = pneg %p239
        %p573 = pneg %p236
        %s574 = sand.u32 %s26, 1
        %s575 = scalar_lea.sflag [#allocation4], %s574
        %s576 = sand.u32 %s258, 1
        %s577 = scalar_lea.vmem [#allocation13], %s576
        %p578 = pneg %p271
        %p579 = pneg %p268
        %p580 = pneg %p292
        %p581 = pneg %p289
        %p582 = pneg %p313
        %p583 = pneg %p310
        %p584 = pneg %p339
        %p585 = pneg %p336
        %s586 = ssub.s32 %s31, 1
        %p587 = scmp.gt.s32.totalorder %s586, 0
        %s588 = scalar_select %p587, %s586, 0
        %p589 = scmp.lt.s32.totalorder %s588, 2
        %s590 = scalar_select %p589, %s588, 2
        %s591 = smul.addr %s590, 4
        %s592 = smul.addr %s591, 4
        %s593 = scalar_lea.vmem %s5, %s592
        %s594 = ssub.s32 %s31, 1
        %p595 = scmp.gt.s32.totalorder %s594, 0
        %s596 = scalar_select %p595, %s594, 0
        %s597 = ssub.s32 %s31, 1
        %p598 = scmp.gt.s32.totalorder %s597, 0
        %s599 = scalar_select %p598, %s597, 0
        %s600 = ssub.s32 %s31, 1
        %p601 = scmp.gt.s32.totalorder %s600, 0
        %s602 = scalar_select %p601, %s600, 0
        %s603 = ssub.s32 %s31, 1
        %p604 = scmp.gt.s32.totalorder %s603, 0
        %s605 = scalar_select %p604, %s603, 0
        %p607 = scmp.eq.s32.totalorder %s31, 0
        // Predicated region
        $region93: #{tpu_custom_call.1} parent=63 // pred_check
          %p608 = pneg %p607
        $region94: #{tpu_custom_call.1} parent=63 // pred_check_branch
          %610 = sbr.rel (%p608) target = $region96
        $region95: #{tpu_custom_call.1} parent=63 // pred_region
          %v611 = vld [vmem:[#allocation3] sm:$0xf]
          %v612 = vunpack.c.l.bf16 %v611
          %vm613 = vcmask 523264
          %v614 = vsel %vm613, %v612, 0.0
          %615 = vadd.xlane.f32.xlu0 %v614
          %v616 = vpop.xlane.xlu0 %615
          %v617 = vmul.f32 %v612, %v612
          %v618 = vsel %vm613, %v617, 0.0
          %619 = vadd.xlane.f32.xlu0 %v618
          %v620 = vpop.xlane.xlu0 %619
          %v621 = vmul.f32 %v616, 0.015625
          %v622 = vmul.f32 %v620, 0.015625
          %v623 = vmul.f32 %v621, %v621
          %v624 = vsub.f32 %v622, %v623
          %v625 = vmax.f32 %v624, 0.0
          %v626 = vsub.f32 %v612, %v621
          %v627 = vadd.f32 %v625, 1e-06
          %v628 = vrsqrt.pop %v627
          %v629 = vmul.f32 %v626, %v628
          %v630 = vmul.f32 %v629, 0.5
          %v631 = vtanh.pop %v630
          %v632 = vmul.f32 %v631, 0.5
          %v633 = vadd.f32 %v632, 0.5
          %v634 = vmul.f32 %v629, %v633
          %v635 = vpack.c.bf16 %v634, %v634
          %v636 = vld [vmem:[%s1] sm:$0xf]
          %v637 = vld [vmem:[%s1 + $0x4] sm:$0xf]
          %v638 = vld [vmem:[%s1 + $0x8] sm:$0xf]
          %v639 = vld [vmem:[%s1 + $0xc] sm:$0xf]
          %v640 = vld [vmem:[%s1 + $0x10] sm:$0xf]
          %v641 = vld [vmem:[%s1 + $0x14] sm:$0xf]
          %v642 = vld [vmem:[%s1 + $0x18] sm:$0xf]
          %v643 = vld [vmem:[%s1 + $0x1c] sm:$0xf]
          %v644 = vld [vmem:[#allocation6] sm:$0x1]
          %v646 = vlaneseq
          %v647 = vshrl.u32 %v646, 7
          %v648 = vsub.s32 0, %v647
          %v649 = vrot.slane %v644, %v648
          %v659 = vunpack.c.l.b16 %v636
          %v660 = vunpack.c.l.b16 %v637
          %v661 = vunpack.c.l.b16 %v638
          %v662 = vunpack.c.l.b16 %v639
          %v663 = vunpack.c.l.b16 %v640
          %v664 = vunpack.c.l.b16 %v641
          %v665 = vunpack.c.l.b16 %v642
          %v666 = vunpack.c.l.b16 %v643
          %v667 = vpack.c.b16 %v660, %v659
          %v668 = vpack.c.b16 %v662, %v661
          %v669 = vpack.c.b16 %v664, %v663
          %v670 = vpack.c.b16 %v666, %v665
          %v676 = vsel %vm613, %v635, 0
          %678 = vmatprep.subr.bf16.mxu0 0
          %679 = vmatpush1.bf16.msra.mxu0 0
          %680 = vmatprep.subr.bf16.mxu0 0
          %681 = vmatpush1.bf16.msra.mxu0 0
          %682 = vmatprep.subr.bf16.mxu0 0
          %683 = vmatpush1.bf16.msra.mxu0 0
          %684 = vmatprep.subr.bf16.mxu0 0
          %685 = vmatpush1.bf16.msra.mxu0 0
          %686 = vmatprep.subr.bf16.mxu0 0
          %687 = vmatpush1.bf16.msra.mxu0 %v670
          %688 = vmatprep.subr.bf16.mxu0 0
          %689 = vmatpush1.bf16.msra.mxu0 %v669
          %690 = vmatprep.subr.bf16.mxu0 0
          %691 = vmatpush1.bf16.msra.mxu0 %v668
          %692 = vmatprep.subr.bf16.mxu0 0
          %693 = vmatpush1.bf16.msra.mxu0 %v667
          %694 = vmatprep.subr.bf16.mxu0 0
          %695 = vmatpush2.bf16.msra.mxu0 0
          %696 = vmatprep.subr.bf16.mxu0 0
          %697 = vmatpush2.bf16.msra.mxu0 0
          %698 = vmatprep.subr.bf16.mxu0 0
          %699 = vmatpush2.bf16.msra.mxu0 0
          %700 = vmatprep.subr.bf16.mxu0 0
          %701 = vmatpush2.bf16.msra.mxu0 0
          %702 = vmatprep.subr.bf16.mxu0 0
          %703 = vmatpush2.bf16.msra.mxu0 0
          %704 = vmatprep.subr.bf16.mxu0 0
          %705 = vmatpush2.bf16.msra.mxu0 0
          %706 = vmatprep.subr.bf16.mxu0 0
          %707 = vmatpush2.bf16.msra.mxu0 0
          %708 = vmatprep.subr.bf16.mxu0 0
          %709 = vmatpush2.bf16.msra.mxu0 0
          %710 = vmatprep.mubr.bf16.mxu0 0
          %711 = vmatmul.mubr.bf16.gmra.mxu0 %v676
          %v712 = vpop.f32.mrf.mxu0
          %v713 = vadd.f32 %v649, %v712
          %v714 = vpop.f32.mrf.mxu0
          %v715 = vpop.f32.mrf.mxu0
          %v716 = vpop.f32.mrf.mxu0
          %717 = vdwg.mxu0
          %vm718 = vcmask 261120
          %v719 = vsel %vm718, %v713, 0.0
          %720 = vadd.xlane.f32.xlu0 %v719
          %v721 = vpop.xlane.xlu0 %720
          %v722 = vmul.f32 %v713, %v713
          %v723 = vsel %vm718, %v722, 0.0
          %724 = vadd.xlane.f32.xlu0 %v723
          %v725 = vpop.xlane.xlu0 %724
          %v726 = vmul.f32 %v721, 0.03125
          %v727 = vmul.f32 %v725, 0.03125
          %v728 = vmul.f32 %v726, %v726
          %v729 = vsub.f32 %v727, %v728
          %v730 = vmax.f32 %v729, 0.0
          %v731 = vsub.f32 %v713, %v726
          %v732 = vadd.f32 %v730, 1e-06
          %v733 = vrsqrt.pop %v732
          %v734 = vmul.f32 %v731, %v733
          %v735 = vmul.f32 %v734, 0.5
          %v736 = vtanh.pop %v735
          %v737 = vmul.f32 %v736, 0.5
          %v738 = vadd.f32 %v737, 0.5
          %v739 = vmul.f32 %v734, %v738
          %v740 = vpack.c.bf16 %v739, %v739
          %v741 = vld [vmem:[#allocation8] sm:$0xf]
          %v742 = vld [vmem:[#allocation8 + $0x4] sm:$0xf]
          %v743 = vld [vmem:[#allocation8 + $0x8] sm:$0xf]
          %v744 = vld [vmem:[#allocation8 + $0xc] sm:$0xf]
          %v745 = vld [vmem:[#allocation9] sm:$0x1]
          %v747 = vlaneseq
          %v748 = vshrl.u32 %v747, 7
          %v749 = vsub.s32 0, %v748
          %v750 = vrot.slane %v745, %v749
          %v756 = vunpack.c.l.b16 %v741
          %v757 = vunpack.c.l.b16 %v742
          %v758 = vunpack.c.l.b16 %v743
          %v759 = vunpack.c.l.b16 %v744
          %v760 = vpack.c.b16 %v757, %v756
          %v761 = vpack.c.b16 %v759, %v758
          %v765 = vsel %vm718, %v740, 0
          %767 = vmatprep.subr.bf16.mxu0 0
          %768 = vmatpush1.bf16.msra.mxu0 0
          %769 = vmatprep.subr.bf16.mxu0 0
          %770 = vmatpush1.bf16.msra.mxu0 0
          %771 = vmatprep.subr.bf16.mxu0 0
          %772 = vmatpush1.bf16.msra.mxu0 0
          %773 = vmatprep.subr.bf16.mxu0 0
          %774 = vmatpush1.bf16.msra.mxu0 0
          %775 = vmatprep.subr.bf16.mxu0 0
          %776 = vmatpush1.bf16.msra.mxu0 0
          %777 = vmatprep.subr.bf16.mxu0 0
          %778 = vmatpush1.bf16.msra.mxu0 0
          %779 = vmatprep.subr.bf16.mxu0 0
          %780 = vmatpush1.bf16.msra.mxu0 %v761
          %781 = vmatprep.subr.bf16.mxu0 0
          %782 = vmatpush1.bf16.msra.mxu0 %v760
          %783 = vmatprep.subr.bf16.mxu0 0
          %784 = vmatpush2.bf16.msra.mxu0 0
          %785 = vmatprep.subr.bf16.mxu0 0
          %786 = vmatpush2.bf16.msra.mxu0 0
          %787 = vmatprep.subr.bf16.mxu0 0
          %788 = vmatpush2.bf16.msra.mxu0 0
          %789 = vmatprep.subr.bf16.mxu0 0
          %790 = vmatpush2.bf16.msra.mxu0 0
          %791 = vmatprep.subr.bf16.mxu0 0
          %792 = vmatpush2.bf16.msra.mxu0 0
          %793 = vmatprep.subr.bf16.mxu0 0
          %794 = vmatpush2.bf16.msra.mxu0 0
          %795 = vmatprep.subr.bf16.mxu0 0
          %796 = vmatpush2.bf16.msra.mxu0 0
          %797 = vmatprep.subr.bf16.mxu0 0
          %798 = vmatpush2.bf16.msra.mxu0 0
          %799 = vmatprep.mubr.bf16.mxu0 0
          %800 = vmatmul.mubr.bf16.gmra.mxu0 %v765
          %v801 = vpop.f32.mrf.mxu0
          %v802 = vadd.f32 %v750, %v801
          %v803 = vpop.f32.mrf.mxu0
          %v804 = vpop.f32.mrf.mxu0
          %v805 = vpop.f32.mrf.mxu0
          %806 = vdwg.mxu0
          %807 = vst.msk [vmem:[#allocation2] sm:$0xff] %vm718, %v802
        $region96: #{tpu_custom_call.1} parent=63 // pred_fallthru
          _
        %p808 = scmp.gt.s32.totalorder %s31, 0
        // Predicated region
        $region97: #{tpu_custom_call.1} parent=63 // pred_check
          %p809 = pneg %p808
        $region98: #{tpu_custom_call.1} parent=63 // pred_check_branch
          %811 = sbr.rel (%p809) target = $region100
        $region99: #{tpu_custom_call.1} parent=63 // pred_region
          %v812 = vld [vmem:[#allocation2] sm:$0xff]
          %vm813 = vcmask 261120
          %v814 = vsel %vm813, %v812, 0.0
          %815 = vadd.xlane.f32.xlu0 %v814
          %v816 = vpop.xlane.xlu0 %815
          %v817 = vmul.f32 %v812, %v812
          %v818 = vsel %vm813, %v817, 0.0
          %819 = vadd.xlane.f32.xlu0 %v818
          %v820 = vpop.xlane.xlu0 %819
          %v821 = vmul.f32 %v816, 0.03125
          %v822 = vmul.f32 %v820, 0.03125
          %v823 = vmul.f32 %v821, %v821
          %v824 = vsub.f32 %v822, %v823
          %v825 = vmax.f32 %v824, 0.0
          %v826 = vsub.f32 %v812, %v821
          %v827 = vadd.f32 %v825, 1e-06
          %v828 = vrsqrt.pop %v827
          %v829 = vmul.f32 %v826, %v828
          %v830 = vmul.f32 %v829, 0.5
          %v831 = vtanh.pop %v830
          %v832 = vmul.f32 %v831, 0.5
          %v833 = vadd.f32 %v832, 0.5
          %v834 = vmul.f32 %v829, %v833
          %v835 = vpack.c.bf16 %v834, %v834
          %v836 = vld [vmem:[%s593] sm:$0xf]
          %v837 = vld [vmem:[%s593 + $0x4] sm:$0xf]
          %v838 = vld [vmem:[%s593 + $0x8] sm:$0xf]
          %v839 = vld [vmem:[%s593 + $0xc] sm:$0xf]
          %v840 = vld [vmem:[%s519] sm:$0x1]
          %v842 = vlaneseq
          %v843 = vshrl.u32 %v842, 7
          %v844 = vsub.s32 0, %v843
          %v845 = vrot.slane %v840, %v844
          %v851 = vunpack.c.l.b16 %v836
          %v852 = vunpack.c.l.b16 %v837
          %v853 = vunpack.c.l.b16 %v838
          %v854 = vunpack.c.l.b16 %v839
          %v855 = vpack.c.b16 %v852, %v851
          %v856 = vpack.c.b16 %v854, %v853
          %v860 = vsel %vm813, %v835, 0
          %862 = vmatprep.subr.bf16.mxu0 0
          %863 = vmatpush1.bf16.msra.mxu0 0
          %864 = vmatprep.subr.bf16.mxu0 0
          %865 = vmatpush1.bf16.msra.mxu0 0
          %866 = vmatprep.subr.bf16.mxu0 0
          %867 = vmatpush1.bf16.msra.mxu0 0
          %868 = vmatprep.subr.bf16.mxu0 0
          %869 = vmatpush1.bf16.msra.mxu0 0
          %870 = vmatprep.subr.bf16.mxu0 0
          %871 = vmatpush1.bf16.msra.mxu0 0
          %872 = vmatprep.subr.bf16.mxu0 0
          %873 = vmatpush1.bf16.msra.mxu0 0
          %874 = vmatprep.subr.bf16.mxu0 0
          %875 = vmatpush1.bf16.msra.mxu0 %v856
          %876 = vmatprep.subr.bf16.mxu0 0
          %877 = vmatpush1.bf16.msra.mxu0 %v855
          %878 = vmatprep.subr.bf16.mxu0 0
          %879 = vmatpush2.bf16.msra.mxu0 0
          %880 = vmatprep.subr.bf16.mxu0 0
          %881 = vmatpush2.bf16.msra.mxu0 0
          %882 = vmatprep.subr.bf16.mxu0 0
          %883 = vmatpush2.bf16.msra.mxu0 0
          %884 = vmatprep.subr.bf16.mxu0 0
          %885 = vmatpush2.bf16.msra.mxu0 0
          %886 = vmatprep.subr.bf16.mxu0 0
          %887 = vmatpush2.bf16.msra.mxu0 0
          %888 = vmatprep.subr.bf16.mxu0 0
          %889 = vmatpush2.bf16.msra.mxu0 0
          %890 = vmatprep.subr.bf16.mxu0 0
          %891 = vmatpush2.bf16.msra.mxu0 0
          %892 = vmatprep.subr.bf16.mxu0 0
          %893 = vmatpush2.bf16.msra.mxu0 0
          %894 = vmatprep.mubr.bf16.mxu0 0
          %895 = vmatmul.mubr.bf16.gmra.mxu0 %v860
          %v896 = vpop.f32.mrf.mxu0
          %v897 = vadd.f32 %v845, %v896
          %v898 = vpop.f32.mrf.mxu0
          %v899 = vpop.f32.mrf.mxu0
          %v900 = vpop.f32.mrf.mxu0
          %901 = vdwg.mxu0
          %v902 = vsel %vm813, %v897, 0.0
          %903 = vadd.xlane.f32.xlu0 %v902
          %v904 = vpop.xlane.xlu0 %903
          %v905 = vmul.f32 %v897, %v897
          %v906 = vsel %vm813, %v905, 0.0
          %907 = vadd.xlane.f32.xlu0 %v906
          %v908 = vpop.xlane.xlu0 %907
          %v909 = vmul.f32 %v904, 0.03125
          %v910 = vmul.f32 %v908, 0.03125
          %v911 = vmul.f32 %v909, %v909
          %v912 = vsub.f32 %v910, %v911
          %v913 = vmax.f32 %v912, 0.0
          %v914 = vsub.f32 %v897, %v909
          %v915 = vadd.f32 %v913, 1e-06
          %v916 = vrsqrt.pop %v915
          %v917 = vmul.f32 %v914, %v916
          %v918 = vmul.f32 %v917, 0.5
          %v919 = vtanh.pop %v918
          %v920 = vmul.f32 %v919, 0.5
          %v921 = vadd.f32 %v920, 0.5
          %v922 = vmul.f32 %v917, %v921
          %v923 = vpack.c.bf16 %v922, %v922
          %v924 = vld [vmem:[%s528] sm:$0xf]
          %v925 = vld [vmem:[%s528 + $0x4] sm:$0xf]
          %v926 = vld [vmem:[%s528 + $0x8] sm:$0xf]
          %v927 = vld [vmem:[%s528 + $0xc] sm:$0xf]
          %v928 = vld [vmem:[%s536] sm:$0x1]
          %v930 = vlaneseq
          %v931 = vshrl.u32 %v930, 7
          %v932 = vsub.s32 0, %v931
          %v933 = vrot.slane %v928, %v932
          %v939 = vunpack.c.l.b16 %v924
          %v940 = vunpack.c.l.b16 %v925
          %v941 = vunpack.c.l.b16 %v926
          %v942 = vunpack.c.l.b16 %v927
          %v943 = vpack.c.b16 %v940, %v939
          %v944 = vpack.c.b16 %v942, %v941
          %v948 = vsel %vm813, %v923, 0
          %950 = vmatprep.subr.bf16.mxu0 0
          %951 = vmatpush1.bf16.msra.mxu0 0
          %952 = vmatprep.subr.bf16.mxu0 0
          %953 = vmatpush1.bf16.msra.mxu0 0
          %954 = vmatprep.subr.bf16.mxu0 0
          %955 = vmatpush1.bf16.msra.mxu0 0
          %956 = vmatprep.subr.bf16.mxu0 0
          %957 = vmatpush1.bf16.msra.mxu0 0
          %958 = vmatprep.subr.bf16.mxu0 0
          %959 = vmatpush1.bf16.msra.mxu0 0
          %960 = vmatprep.subr.bf16.mxu0 0
          %961 = vmatpush1.bf16.msra.mxu0 0
          %962 = vmatprep.subr.bf16.mxu0 0
          %963 = vmatpush1.bf16.msra.mxu0 %v944
          %964 = vmatprep.subr.bf16.mxu0 0
          %965 = vmatpush1.bf16.msra.mxu0 %v943
          %966 = vmatprep.subr.bf16.mxu0 0
          %967 = vmatpush2.bf16.msra.mxu0 0
          %968 = vmatprep.subr.bf16.mxu0 0
          %969 = vmatpush2.bf16.msra.mxu0 0
          %970 = vmatprep.subr.bf16.mxu0 0
          %971 = vmatpush2.bf16.msra.mxu0 0
          %972 = vmatprep.subr.bf16.mxu0 0
          %973 = vmatpush2.bf16.msra.mxu0 0
          %974 = vmatprep.subr.bf16.mxu0 0
          %975 = vmatpush2.bf16.msra.mxu0 0
          %976 = vmatprep.subr.bf16.mxu0 0
          %977 = vmatpush2.bf16.msra.mxu0 0
          %978 = vmatprep.subr.bf16.mxu0 0
          %979 = vmatpush2.bf16.msra.mxu0 0
          %980 = vmatprep.subr.bf16.mxu0 0
          %981 = vmatpush2.bf16.msra.mxu0 0
          %982 = vmatprep.mubr.bf16.mxu0 0
          %983 = vmatmul.mubr.bf16.gmra.mxu0 %v948
          %v984 = vpop.f32.mrf.mxu0
          %v985 = vadd.f32 %v933, %v984
          %v986 = vpop.f32.mrf.mxu0
          %v987 = vpop.f32.mrf.mxu0
          %v988 = vpop.f32.mrf.mxu0
          %989 = vdwg.mxu0
          %v990 = vadd.f32 %v812, %v985
          %991 = vst.msk [vmem:[#allocation2] sm:$0xff] %vm813, %v990
        $region100: #{tpu_custom_call.1} parent=63 // pred_fallthru
          _
        %p992 = scmp.eq.s32.totalorder %s31, 3
        // Predicated region
        $region101: #{tpu_custom_call.1} parent=63 // pred_check
          %p993 = pneg %p992
        $region102: #{tpu_custom_call.1} parent=63 // pred_check_branch
          %995 = sbr.rel (%p993) target = $region104
        $region103: #{tpu_custom_call.1} parent=63 // pred_region
          %v996 = vld [vmem:[#allocation2] sm:$0xff]
          %v997 = vpack.c.bf16 %v996, %v996
          %v998 = vld [vmem:[%s9] sm:$0xf]
          %v999 = vld [vmem:[%s9 + $0x4] sm:$0xf]
          %v1000 = vld [vmem:[%s9 + $0x8] sm:$0xf]
          %v1001 = vld [vmem:[%s9 + $0xc] sm:$0xf]
          %v1002 = vld [vmem:[%s10] sm:$0x1]
          %v1004 = vlaneseq
          %v1005 = vshrl.u32 %v1004, 7
          %v1006 = vsub.s32 0, %v1005
          %v1007 = vrot.slane %v1002, %v1006
          %v1013 = vunpack.c.l.b16 %v998
          %v1014 = vunpack.c.l.b16 %v999
          %v1015 = vunpack.c.l.b16 %v1000
          %v1016 = vunpack.c.l.b16 %v1001
          %v1017 = vpack.c.b16 %v1014, %v1013
          %v1018 = vpack.c.b16 %v1016, %v1015
          %vm1021 = vcmask 261120
          %v1023 = vsel %vm1021, %v997, 0
          %1025 = vmatprep.subr.bf16.mxu0 0
          %1026 = vmatpush1.bf16.msra.mxu0 0
          %1027 = vmatprep.subr.bf16.mxu0 0
          %1028 = vmatpush1.bf16.msra.mxu0 0
          %1029 = vmatprep.subr.bf16.mxu0 0
          %1030 = vmatpush1.bf16.msra.mxu0 0
          %1031 = vmatprep.subr.bf16.mxu0 0
          %1032 = vmatpush1.bf16.msra.mxu0 0
          %1033 = vmatprep.subr.bf16.mxu0 0
          %1034 = vmatpush1.bf16.msra.mxu0 0
          %1035 = vmatprep.subr.bf16.mxu0 0
          %1036 = vmatpush1.bf16.msra.mxu0 0
          %1037 = vmatprep.subr.bf16.mxu0 0
          %1038 = vmatpush1.bf16.msra.mxu0 %v1018
          %1039 = vmatprep.subr.bf16.mxu0 0
          %1040 = vmatpush1.bf16.msra.mxu0 %v1017
          %1041 = vmatprep.subr.bf16.mxu0 0
          %1042 = vmatpush2.bf16.msra.mxu0 0
          %1043 = vmatprep.subr.bf16.mxu0 0
          %1044 = vmatpush2.bf16.msra.mxu0 0
          %1045 = vmatprep.subr.bf16.mxu0 0
          %1046 = vmatpush2.bf16.msra.mxu0 0
          %1047 = vmatprep.subr.bf16.mxu0 0
          %1048 = vmatpush2.bf16.msra.mxu0 0
          %1049 = vmatprep.subr.bf16.mxu0 0
          %1050 = vmatpush2.bf16.msra.mxu0 0
          %1051 = vmatprep.subr.bf16.mxu0 0
          %1052 = vmatpush2.bf16.msra.mxu0 0
          %1053 = vmatprep.subr.bf16.mxu0 0
          %1054 = vmatpush2.bf16.msra.mxu0 0
          %1055 = vmatprep.subr.bf16.mxu0 0
          %1056 = vmatpush2.bf16.msra.mxu0 0
          %1057 = vmatprep.mubr.bf16.mxu0 0
          %1058 = vmatmul.mubr.bf16.gmra.mxu0 %v1023
          %v1059 = vpop.f32.mrf.mxu0
          %v1060 = vadd.f32 %v1007, %v1059
          %v1061 = vpop.f32.mrf.mxu0
          %v1062 = vpop.f32.mrf.mxu0
          %v1063 = vpop.f32.mrf.mxu0
          %1064 = vdwg.mxu0
          %1065 = vst [vmem:[#allocation14] sm:$0xff] %v1060
        $region104: #{tpu_custom_call.1} parent=63 // pred_fallthru
          _
        // Predicated region
        $region105: #{tpu_custom_call.1} parent=63 // pred_check
          %p1066 = pneg %p336
        $region106: #{tpu_custom_call.1} parent=63 // pred_check_branch
          %1068 = sbr.rel (%p1066) target = $region108
        $region107: #{tpu_custom_call.1} parent=63 // pred_region
          %s1070 = ssub.s32 128, 128
          %1071 = vsyncadd [#allocation5], %s1070
          %s1072 = smul.addr %s30, 128
          %s1073 = scalar_lea.hbm %s11, %s1072
          %s1075 = sshll.u32 [#allocation14], 4
          %s1076 = int_to_ptr.vmem [resolvable:$true] %s1075
          %1078 = dma.vmem_to_hbm [thread:$0]  %s1076, 128, %s1073, [#allocation5]
        $region108: #{tpu_custom_call.1} parent=63 // pred_fallthru
          _
        // Predicated region
        $region109: #{tpu_custom_call.1} parent=63 // pred_check
          %p1079 = pneg %p336
        $region110: #{tpu_custom_call.1} parent=63 // pred_check_branch
          %1081 = sbr.rel (%p1079) target = $region112
        $region111: #{tpu_custom_call.1} parent=63 // pred_region
          %1082 = dma.done [#allocation5], 128
        $region112: #{tpu_custom_call.1} parent=63 // pred_fallthru
          _
      $region64: #{tpu_custom_call.1} parent=5 // pred_fallthru
        _
      %p1083 = scmp.le.s32.totalorder 2, %s21
      // Predicated region
      $region113: #{tpu_custom_call.1} parent=5 // pred_check
        %p1084 = pneg %p1083
      $region114: #{tpu_custom_call.1} parent=5 // pred_check_branch
        %1086 = sbr.rel (%p1084) target = $region116
      $region115: #{tpu_custom_call.1} parent=5 // pred_region
        %s1087 = ssub.s32 %s21, 2
      $region116: #{tpu_custom_call.1} parent=5 // pred_fallthru
        _
    $region6: #{tpu_custom_call.1} parent=1 // loop_footer
      %s25 = sadd.s32 1, %s21
    $region7: #{tpu_custom_call.1} parent=1 // loop_footer_branch
      %20 = sbr.rel target = $region3
    $region8: #{tpu_custom_call.1} parent=1 // loop_exit
      _
    %1088 = vsyncpa [#allocation4], 1
    %s1089 = scalar_lea.sflag [#allocation4], 1
    %1090 = vsyncpa %s1089, 1
    %1091 = vsyncpa [#allocation7], 1
    %1092 = vsyncpa [#allocation10], 1
    %1093 = vsyncpa [#allocation5], 1
    %s1094 = scalar_lea.sflag [#allocation5], 1
    %1095 = vsyncpa %s1094, 1

</llo_original>
